<compile_context>
chip_gen: v5e
topology: v5e:2x2
jax: 0.10.0
libtpu: 0.0.40
codegen_flags: <defaults>
</compile_context>

<pallas_src>
import jax
import jax.numpy as jnp
from jax.experimental import pallas as pl
from jax.experimental.pallas import tpu as pltpu

# ---------------------------------------------------------------- constants
C_IN = 3          # xyz only (use_xyz=True, no intensity)
C_MID = 64        # backbone hidden width
C_FEAT = 128      # rcnn_input_channels / backbone feature width
REG_CH = 76       # per_loc_bin_num*4 + NUM_HEAD_BIN*2 + 3 + 1 (repo defaults)
BN_EPS = 1e-5
DEFAULT_TM = 1024  # points per grid tile (must be a multiple of 128)


def _round_up(n, m):
    return ((n + m - 1) // m) * m


# ---------------------------------------------------------------- kernel
def rpn_fused_kernel(x_ref,
                     wb1_ref, w2_ref, b2_ref,
                     wh_ref, bh_ref, wo_ref, bo_ref,
                     feat_t_ref, head_ref):
    """One tile of TM points: backbone MLP + fused cls/reg heads."""
    x = x_ref[0]                     # (TM, 3) f32
    wb1 = wb1_ref[...]               # (8, 64) f32: rows 0..2 = W1, row 3 = b1

    # Layer 1 (3 -> 64) on the VPU: K=3 is too shallow for the MXU, so use
    # three broadcast multiply-adds instead of a padded matmul.
    h = (x[:, 0:1] * wb1[0:1, :]
         + x[:, 1:2] * wb1[1:2, :]
         + x[:, 2:3] * wb1[2:3, :]
         + wb1[3:4, :])
    h = jnp.maximum(h, 0.0)          # (TM, 64) f32

    # Layer 2 (64 -> 128) on the MXU: bf16 operands, f32 accumulation.
    feat = jnp.dot(h.astype(jnp.bfloat16), w2_ref[...],
                   preferred_element_type=jnp.float32) + b2_ref[...]
    feat = jnp.maximum(feat, 0.0)    # (TM, 128) f32

    # backbone_features emitted pre-transposed (C_FEAT, TM): XLU transpose,
    # lane-dense store, removes the wrapper-side HBM round trip.
    feat_t_ref[0] = feat.T

    # Fused cls+reg heads:
    #   H   = relu(feat @ [Wc1 | Wr1] + [bc1 | br1])            (TM, 256)
    #   OUT = H @ blockdiag(wc2 -> lane 0, wr2 -> lanes 1..76)  (TM, 128)
    fb = feat.astype(jnp.bfloat16)
    hh = jnp.dot(fb, wh_ref[...], preferred_element_type=jnp.float32) + bh_ref[...]
    hh = jnp.maximum(hh, 0.0)        # (TM, 256) f32
    out = jnp.dot(hh.astype(jnp.bfloat16), wo_ref[...],
                  preferred_element_type=jnp.float32) + bo_ref[...]
    head_ref[0] = out                # (TM, 128): lane 0 = cls, lanes 1..76 = reg


# ---------------------------------------------------------------- params
def _fold_bn(w, b, gamma, beta, mean, var):
    """Fold inference-mode BatchNorm1d into a (Cin,Cout) weight + (1,Cout) bias."""
    scale = gamma / jnp.sqrt(var + BN_EPS)
    shift = beta - mean * scale
    return w * scale[None, :], (b * scale + shift)[None, :]


def init_params(key):
    """Random weights, BN folded, packed into MXU/VPU-friendly slabs."""
    def lin(k, cin, cout, std=0.05):
        kw, kb = jax.random.split(k)
        w = std * jax.random.normal(kw, (cin, cout), jnp.float32)
        b = 0.01 * jax.random.normal(kb, (cout,), jnp.float32)
        return w, b

    def bn(k, c):
        kg, kb = jax.random.split(k)
        gamma = 1.0 + 0.01 * jax.random.normal(kg, (c,), jnp.float32)
        beta = 0.01 * jax.random.normal(kb, (c,), jnp.float32)
        return gamma, beta, jnp.zeros((c,), jnp.float32), jnp.ones((c,), jnp.float32)

    ks = jax.random.split(key, 10)
    w1, b1 = _fold_bn(*lin(ks[0], C_IN, C_MID), *bn(ks[1], C_MID))
    w2, b2 = _fold_bn(*lin(ks[2], C_MID, C_FEAT), *bn(ks[3], C_FEAT))
    wc1, bc1 = _fold_bn(*lin(ks[4], C_FEAT, C_FEAT), *bn(ks[5], C_FEAT))
    wc2, bc2 = lin(ks[6], C_FEAT, 1)
    wr1, br1 = _fold_bn(*lin(ks[7], C_FEAT, C_FEAT), *bn(ks[8], C_FEAT))
    wr2, br2 = lin(ks[9], C_FEAT, REG_CH)

    # Pack layer-1 weight+bias into one small f32 slab (rows 0..2 = W1, row 3 = b1).
    wb1 = jnp.zeros((8, C_MID), jnp.float32)
    wb1 = wb1.at[0:3, :].set(w1).at[3:4, :].set(b1)

    # Fused head hidden layer: (128, 256) = [Wc1 | Wr1].
    wh = jnp.concatenate([wc1, wr1], axis=1).astype(jnp.bfloat16)
    bh = jnp.concatenate([bc1, br1], axis=1)                       # (1, 256) f32

    # Block-diagonal fused head output: (256, 128), cls -> lane 0, reg -> lanes 1..76.
    wo = jnp.zeros((2 * C_FEAT, C_FEAT), jnp.float32)
    wo = wo.at[:C_FEAT, 0:1].set(wc2)
    wo = wo.at[C_FEAT:, 1:1 + REG_CH].set(wr2)
    bo = jnp.zeros((1, C_FEAT), jnp.float32)
    bo = bo.at[0, 0].set(bc2[0]).at[0, 1:1 + REG_CH].set(br2)

    return (wb1,
            w2.astype(jnp.bfloat16), b2,
            wh, bh,
            wo.astype(jnp.bfloat16), bo)


# ---------------------------------------------------------------- wrapper
def point_rcnn_forward(input_data, params, tm=DEFAULT_TM):
    """input_data: {'pts_input': (B, N, 3) float32}  ->  RPN output dict."""
    pts = input_data["pts_input"]
    B, N, _ = pts.shape
    assert tm % 128 == 0, "point tile must be a multiple of 128 lanes"

    # Clamp the tile to the (lane-rounded) point count, pad the remainder.
    TM = min(tm, _round_up(N, 128))
    N_pad = _round_up(N, TM)
    x = pts.astype(jnp.float32)
    if N_pad != N:
        x = jnp.pad(x, ((0, 0), (0, N_pad - N), (0, 0)))
    n_tiles = N_pad // TM

    wb1, w2, b2, wh, bh, wo, bo = params
    const = lambda shape: pl.BlockSpec(shape, lambda b, n: (0, 0))

    feat_t, head = pl.pallas_call(
        rpn_fused_kernel,
        out_shape=(
            jax.ShapeDtypeStruct((B, C_FEAT, N_pad), jnp.float32),   # backbone_features
            jax.ShapeDtypeStruct((B, N_pad, C_FEAT), jnp.float32),   # packed cls|reg
        ),
        grid_spec=pltpu.PrefetchScalarGridSpec(
            num_scalar_prefetch=0,
            grid=(B, n_tiles),
            in_specs=[
                pl.BlockSpec((1, TM, C_IN), lambda b, n: (b, n, 0)),  # points tile
                const(wb1.shape),
                const(w2.shape), const(b2.shape),
                const(wh.shape), const(bh.shape),
                const(wo.shape), const(bo.shape),
            ],
            out_specs=[
                pl.BlockSpec((1, C_FEAT, TM), lambda b, n: (b, 0, n)),
                pl.BlockSpec((1, TM, C_FEAT), lambda b, n: (b, n, 0)),
            ],
        ),
        compiler_params=pltpu.CompilerParams(
            dimension_semantics=("parallel", "parallel")),
    )(x, wb1, w2, b2, wh, bh, wo, bo)

    if N_pad != N:
        feat_t = feat_t[:, :, :N]
        head = head[:, :N, :]

    return {
        "rpn_cls": head[:, :, 0:1],                 # (B, N, 1)
        "rpn_reg": head[:, :, 1:1 + REG_CH],        # (B, N, 76)
        "backbone_xyz": pts,                        # (B, N, 3)
        "backbone_features": feat_t,                # (B, 128, N)
    }


# ---------------------------------------------------------------- reference
def _reference_forward(pts, params):
    """Pure-JAX reference (same bf16 operand rounding as the kernel)."""
    wb1, w2, b2, wh, bh, wo, bo = params
    x = pts.astype(jnp.float32)

    def mm(a, w):
        return jnp.dot(a.astype(jnp.bfloat16).astype(jnp.float32),
                       w.astype(jnp.float32))

    h = jnp.maximum(jnp.einsum("bnc,ck->bnk", x, wb1[0:3]) + wb1[3:4], 0.0)
    feat = jnp.maximum(mm(h, w2) + b2, 0.0)
    hh = jnp.maximum(mm(feat, wh) + bh, 0.0)
    out = mm(hh, wo) + bo
    return {
        "rpn_cls": out[..., 0:1],
        "rpn_reg": out[..., 1:1 + REG_CH],
        "backbone_features": jnp.transpose(feat, (0, 2, 1)),
    }


# ---------------------------------------------------------------- main
if __name__ == "__main__":
    key = jax.random.PRNGKey(0)
    k_pts, k_par = jax.random.split(key)

    B, N = 2, 256  # small demo shapes; TM clamps to 256 -> grid (2, 1)
    pts_input = jax.random.normal(k_pts, (B, N, C_IN), jnp.float32)
    params = init_params(k_par)

    out = point_rcnn_forward({"pts_input": pts_input}, params)
    jax.block_until_ready(out)

    assert out["rpn_cls"].shape == (B, N, 1)
    assert out["rpn_reg"].shape == (B, N, REG_CH)
    assert out["backbone_features"].shape == (B, C_FEAT, N)
    assert out["backbone_xyz"].shape == (B, N, C_IN)

    ref = _reference_forward(pts_input, params)
    for name in ("rpn_cls", "rpn_reg", "backbone_features"):
        assert jnp.allclose(out[name], ref[name], rtol=5e-2, atol=5e-3), name

    # Exercise the padded / non-multiple-of-TM path as well.
    N2 = 200
    pts2 = jax.random.normal(jax.random.PRNGKey(1), (B, N2, C_IN), jnp.float32)
    out2 = point_rcnn_forward({"pts_input": pts2}, params)
    jax.block_until_ready(out2)
    ref2 = _reference_forward(pts2, params)
    assert out2["rpn_reg"].shape == (B, N2, REG_CH)
    assert jnp.allclose(out2["rpn_cls"], ref2["rpn_cls"], rtol=5e-2, atol=5e-3)

    print("KERNEL_OK")
</pallas_src>

<mosaic_0001>
module attributes {stable_mosaic.version = 11 : i64} {
  func.func @rpn_fused_kernel(%arg0: i32, %arg1: i32, %arg2: memref<1x256x3xf32, #tpu.memory_space<vmem>>, %arg3: memref<8x64xf32, #tpu.memory_space<vmem>>, %arg4: memref<64x128xbf16, #tpu.memory_space<vmem>>, %arg5: memref<1x128xf32, #tpu.memory_space<vmem>>, %arg6: memref<128x256xbf16, #tpu.memory_space<vmem>>, %arg7: memref<1x256xf32, #tpu.memory_space<vmem>>, %arg8: memref<256x128xbf16, #tpu.memory_space<vmem>>, %arg9: memref<1x128xf32, #tpu.memory_space<vmem>>, %arg10: memref<1x128x256xf32, #tpu.memory_space<vmem>>, %arg11: memref<1x256x128xf32, #tpu.memory_space<vmem>>) attributes {dimension_semantics = [#tpu.dimension_semantics<parallel>, #tpu.dimension_semantics<parallel>], iteration_bounds = array<i64: 2, 1>, scalar_prefetch = 0 : i64, scratch_operands = 0 : i64, tpu.core_type = #tpu.core_type<tc>, window_params = [{transform_indices = @transform_0, window_bounds = array<i64: 1, 256, 3>}, {pipeline_mode = #tpu.pipeline_mode<synchronous>, transform_indices = @transform_1, window_bounds = array<i64: 8, 64>}, {pipeline_mode = #tpu.pipeline_mode<synchronous>, transform_indices = @transform_2, window_bounds = array<i64: 64, 128>}, {pipeline_mode = #tpu.pipeline_mode<synchronous>, transform_indices = @transform_3, window_bounds = array<i64: 1, 128>}, {pipeline_mode = #tpu.pipeline_mode<synchronous>, transform_indices = @transform_4, window_bounds = array<i64: 128, 256>}, {pipeline_mode = #tpu.pipeline_mode<synchronous>, transform_indices = @transform_5, window_bounds = array<i64: 1, 256>}, {pipeline_mode = #tpu.pipeline_mode<synchronous>, transform_indices = @transform_6, window_bounds = array<i64: 256, 128>}, {pipeline_mode = #tpu.pipeline_mode<synchronous>, transform_indices = @transform_7, window_bounds = array<i64: 1, 128>}, {transform_indices = @transform_8, window_bounds = array<i64: 1, 128, 256>}, {transform_indices = @transform_9, window_bounds = array<i64: 1, 256, 128>}]} {
    %c0 = arith.constant 0 : index
    %c0_0 = arith.constant 0 : index
    %c0_1 = arith.constant 0 : index
    %0 = vector.load %arg2[%c0, %c0_0, %c0_1] : memref<1x256x3xf32, #tpu.memory_space<vmem>>, vector<1x256x3xf32>
    %1 = vector.shape_cast %0 : vector<1x256x3xf32> to vector<256x3xf32>
    %c0_2 = arith.constant 0 : index
    %c0_3 = arith.constant 0 : index
    %2 = vector.load %arg3[%c0_2, %c0_3] : memref<8x64xf32, #tpu.memory_space<vmem>>, vector<8x64xf32>
    %3 = vector.extract_strided_slice %1 {offsets = [0, 0], sizes = [256, 1], strides = [1, 1]} : vector<256x3xf32> to vector<256x1xf32>
    %4 = vector.extract_strided_slice %2 {offsets = [0, 0], sizes = [1, 64], strides = [1, 1]} : vector<8x64xf32> to vector<1x64xf32>
    %5 = vector.broadcast %3 : vector<256x1xf32> to vector<256x64xf32>
    %6 = vector.broadcast %4 : vector<1x64xf32> to vector<256x64xf32>
    %7 = arith.mulf %5, %6 : vector<256x64xf32>
    %8 = vector.extract_strided_slice %1 {offsets = [0, 1], sizes = [256, 1], strides = [1, 1]} : vector<256x3xf32> to vector<256x1xf32>
    %9 = vector.extract_strided_slice %2 {offsets = [1, 0], sizes = [1, 64], strides = [1, 1]} : vector<8x64xf32> to vector<1x64xf32>
    %10 = vector.broadcast %8 : vector<256x1xf32> to vector<256x64xf32>
    %11 = vector.broadcast %9 : vector<1x64xf32> to vector<256x64xf32>
    %12 = arith.mulf %10, %11 : vector<256x64xf32>
    %13 = arith.addf %7, %12 : vector<256x64xf32>
    %14 = vector.extract_strided_slice %1 {offsets = [0, 2], sizes = [256, 1], strides = [1, 1]} : vector<256x3xf32> to vector<256x1xf32>
    %15 = vector.extract_strided_slice %2 {offsets = [2, 0], sizes = [1, 64], strides = [1, 1]} : vector<8x64xf32> to vector<1x64xf32>
    %16 = vector.broadcast %14 : vector<256x1xf32> to vector<256x64xf32>
    %17 = vector.broadcast %15 : vector<1x64xf32> to vector<256x64xf32>
    %18 = arith.mulf %16, %17 : vector<256x64xf32>
    %19 = arith.addf %13, %18 : vector<256x64xf32>
    %20 = vector.extract_strided_slice %2 {offsets = [3, 0], sizes = [1, 64], strides = [1, 1]} : vector<8x64xf32> to vector<1x64xf32>
    %21 = vector.broadcast %20 : vector<1x64xf32> to vector<256x64xf32>
    %22 = arith.addf %19, %21 : vector<256x64xf32>
    %cst = arith.constant 0.000000e+00 : f32
    %23 = vector.broadcast %cst : f32 to vector<256x64xf32>
    %24 = arith.maximumf %22, %23 : vector<256x64xf32>
    %25 = arith.truncf %24 : vector<256x64xf32> to vector<256x64xbf16>
    %c0_4 = arith.constant 0 : index
    %c0_5 = arith.constant 0 : index
    %26 = vector.load %arg4[%c0_4, %c0_5] : memref<64x128xbf16, #tpu.memory_space<vmem>>, vector<64x128xbf16>
    %cst_6 = arith.constant dense<0.000000e+00> : vector<256x128xf32>
    %27 = tpu.matmul %25, %26, %cst_6 {dimension_numbers = #tpu.dot_dimension_numbers<[1], [0], [0], [1], [0, 0, 1, 1], [], []>} : vector<256x64xbf16>, vector<64x128xbf16>, vector<256x128xf32> -> vector<256x128xf32>
    %c0_7 = arith.constant 0 : index
    %c0_8 = arith.constant 0 : index
    %28 = vector.load %arg5[%c0_7, %c0_8] : memref<1x128xf32, #tpu.memory_space<vmem>>, vector<1x128xf32>
    %29 = vector.broadcast %28 : vector<1x128xf32> to vector<256x128xf32>
    %30 = arith.addf %27, %29 : vector<256x128xf32>
    %cst_9 = arith.constant 0.000000e+00 : f32
    %31 = vector.broadcast %cst_9 : f32 to vector<256x128xf32>
    %32 = arith.maximumf %30, %31 : vector<256x128xf32>
    %33 = tpu.transpose %32, [1, 0] : vector<256x128xf32> -> vector<128x256xf32>
    %c0_10 = arith.constant 0 : index
    %c0_11 = arith.constant 0 : index
    %c0_12 = arith.constant 0 : index
    %34 = vector.load %arg10[%c0_10, %c0_11, %c0_12] : memref<1x128x256xf32, #tpu.memory_space<vmem>>, vector<1x128x256xf32>
    %35 = vector.shape_cast %34 : vector<1x128x256xf32> to vector<128x256xf32>
    %36 = vector.shape_cast %33 : vector<128x256xf32> to vector<1x128x256xf32>
    tpu.vector_store %arg10[%c0_10, %c0_11, %c0_12], %36 {strides = array<i32>} : memref<1x128x256xf32, #tpu.memory_space<vmem>>, vector<1x128x256xf32>,
    %37 = arith.truncf %32 : vector<256x128xf32> to vector<256x128xbf16>
    %c0_13 = arith.constant 0 : index
    %c0_14 = arith.constant 0 : index
    %38 = vector.load %arg6[%c0_13, %c0_14] : memref<128x256xbf16, #tpu.memory_space<vmem>>, vector<128x256xbf16>
    %cst_15 = arith.constant dense<0.000000e+00> : vector<256x256xf32>
    %39 = tpu.matmul %37, %38, %cst_15 {dimension_numbers = #tpu.dot_dimension_numbers<[1], [0], [0], [1], [0, 0, 1, 1], [], []>} : vector<256x128xbf16>, vector<128x256xbf16>, vector<256x256xf32> -> vector<256x256xf32>
    %c0_16 = arith.constant 0 : index
    %c0_17 = arith.constant 0 : index
    %40 = vector.load %arg7[%c0_16, %c0_17] : memref<1x256xf32, #tpu.memory_space<vmem>>, vector<1x256xf32>
    %41 = vector.broadcast %40 : vector<1x256xf32> to vector<256x256xf32>
    %42 = arith.addf %39, %41 : vector<256x256xf32>
    %cst_18 = arith.constant 0.000000e+00 : f32
    %43 = vector.broadcast %cst_18 : f32 to vector<256x256xf32>
    %44 = arith.maximumf %42, %43 : vector<256x256xf32>
    %45 = arith.truncf %44 : vector<256x256xf32> to vector<256x256xbf16>
    %c0_19 = arith.constant 0 : index
    %c0_20 = arith.constant 0 : index
    %46 = vector.load %arg8[%c0_19, %c0_20] : memref<256x128xbf16, #tpu.memory_space<vmem>>, vector<256x128xbf16>
    %cst_21 = arith.constant dense<0.000000e+00> : vector<256x128xf32>
    %47 = tpu.matmul %45, %46, %cst_21 {dimension_numbers = #tpu.dot_dimension_numbers<[1], [0], [0], [1], [0, 0, 1, 1], [], []>} : vector<256x256xbf16>, vector<256x128xbf16>, vector<256x128xf32> -> vector<256x128xf32>
    %c0_22 = arith.constant 0 : index
    %c0_23 = arith.constant 0 : index
    %48 = vector.load %arg9[%c0_22, %c0_23] : memref<1x128xf32, #tpu.memory_space<vmem>>, vector<1x128xf32>
    %49 = vector.broadcast %48 : vector<1x128xf32> to vector<256x128xf32>
    %50 = arith.addf %47, %49 : vector<256x128xf32>
    %c0_24 = arith.constant 0 : index
    %c0_25 = arith.constant 0 : index
    %c0_26 = arith.constant 0 : index
    %51 = vector.load %arg11[%c0_24, %c0_25, %c0_26] : memref<1x256x128xf32, #tpu.memory_space<vmem>>, vector<1x256x128xf32>
    %52 = vector.shape_cast %51 : vector<1x256x128xf32> to vector<256x128xf32>
    %53 = vector.shape_cast %50 : vector<256x128xf32> to vector<1x256x128xf32>
    tpu.vector_store %arg11[%c0_24, %c0_25, %c0_26], %53 {strides = array<i32>} : memref<1x256x128xf32, #tpu.memory_space<vmem>>, vector<1x256x128xf32>,
    return
  }
  func.func @transform_0(%arg0: i32, %arg1: i32) -> (i32, i32, i32) {
    %c0_i32 = arith.constant 0 : i32
    %c0_i32_0 = arith.constant 0 : i32
    return %arg0, %arg1, %c0_i32 : i32, i32, i32
  }
  func.func @transform_1(%arg0: i32, %arg1: i32) -> (i32, i32) {
    %c0_i32 = arith.constant 0 : i32
    %c0_i32_0 = arith.constant 0 : i32
    %c0_i32_1 = arith.constant 0 : i32
    return %c0_i32, %c0_i32_0 : i32, i32
  }
  func.func @transform_2(%arg0: i32, %arg1: i32) -> (i32, i32) {
    %c0_i32 = arith.constant 0 : i32
    %c0_i32_0 = arith.constant 0 : i32
    %c0_i32_1 = arith.constant 0 : i32
    return %c0_i32, %c0_i32_0 : i32, i32
  }
  func.func @transform_3(%arg0: i32, %arg1: i32) -> (i32, i32) {
    %c0_i32 = arith.constant 0 : i32
    %c0_i32_0 = arith.constant 0 : i32
    %c0_i32_1 = arith.constant 0 : i32
    return %c0_i32, %c0_i32_0 : i32, i32
  }
  func.func @transform_4(%arg0: i32, %arg1: i32) -> (i32, i32) {
    %c0_i32 = arith.constant 0 : i32
    %c0_i32_0 = arith.constant 0 : i32
    %c0_i32_1 = arith.constant 0 : i32
    return %c0_i32, %c0_i32_0 : i32, i32
  }
  func.func @transform_5(%arg0: i32, %arg1: i32) -> (i32, i32) {
    %c0_i32 = arith.constant 0 : i32
    %c0_i32_0 = arith.constant 0 : i32
    %c0_i32_1 = arith.constant 0 : i32
    return %c0_i32, %c0_i32_0 : i32, i32
  }
  func.func @transform_6(%arg0: i32, %arg1: i32) -> (i32, i32) {
    %c0_i32 = arith.constant 0 : i32
    %c0_i32_0 = arith.constant 0 : i32
    %c0_i32_1 = arith.constant 0 : i32
    return %c0_i32, %c0_i32_0 : i32, i32
  }
  func.func @transform_7(%arg0: i32, %arg1: i32) -> (i32, i32) {
    %c0_i32 = arith.constant 0 : i32
    %c0_i32_0 = arith.constant 0 : i32
    %c0_i32_1 = arith.constant 0 : i32
    return %c0_i32, %c0_i32_0 : i32, i32
  }
  func.func @transform_8(%arg0: i32, %arg1: i32) -> (i32, i32, i32) {
    %c0_i32 = arith.constant 0 : i32
    %c0_i32_0 = arith.constant 0 : i32
    return %arg0, %c0_i32, %arg1 : i32, i32, i32
  }
  func.func @transform_9(%arg0: i32, %arg1: i32) -> (i32, i32, i32) {
    %c0_i32 = arith.constant 0 : i32
    %c0_i32_0 = arith.constant 0 : i32
    return %arg0, %arg1, %c0_i32 : i32, i32, i32
  }
}

</mosaic_0001>

<llo_original>
// kernel: tpu_custom_call.1
$region0: #{tpu_custom_call.1}
  #allocation0 [shape = 'u32[]', space=smem, size = 0x4, offset = 0x4, fixed_abs, tag = 'smem constant byte address 0x4 - core index']
  #allocation1 [shape = 'u32[72,128]{1,0:T(1,128)}', space=vmem, size = 0x9000, scoped, tag = 'internal scratch']
  %s0 = inlined_call_operand.vmem [shape: f32[2,256,3], index: 0, kind: input, shape index: {}]
  %s1 = inlined_call_operand.vmem [shape: f32[8,64], index: 1, kind: input, shape index: {}]
  %s2 = inlined_call_operand.vmem [shape: bf16[64,128], index: 2, kind: input, shape index: {}]
  %s3 = inlined_call_operand.vmem [shape: f32[1,128], index: 3, kind: input, shape index: {}]
  %s4 = inlined_call_operand.vmem [shape: bf16[128,256], index: 4, kind: input, shape index: {}]
  %s5 = inlined_call_operand.vmem [shape: f32[1,256], index: 5, kind: input, shape index: {}]
  %s6 = inlined_call_operand.vmem [shape: bf16[256,128], index: 6, kind: input, shape index: {}]
  %s7 = inlined_call_operand.vmem [shape: f32[1,128], index: 7, kind: input, shape index: {}]
  %s8 = inlined_call_operand.hbm [shape: f32[2,128,256], index: 8, kind: output, shape index: {0}]
  %s9 = inlined_call_operand.hbm [shape: f32[2,256,128], index: 9, kind: output, shape index: {1}]
  %10 = xla_tuple %s8, %s9
  %s11 = sld [smem:[#allocation0]]
  $region73: #{tpu_custom_call.1} parent=0
    _
  %s13 = ssub.s32 1, %s11
  %s14 = scalar_select 0, %s13, %s11
  $region1: #{tpu_custom_call.1} parent=0
    #allocation2 [shape = 'u8[262144]{0}', space=vmem, size = 0x40000, scoped, tag = 'output window, operand 0']
    #allocation3 [shape = 's32[2]{0}', space=sflag, size = 0x8, scoped, tag = 'scoped memory for tpu_custom_call.1']
    #allocation4 [shape = 'u8[262144]{0}', space=vmem, size = 0x40000, scoped, tag = 'output window, operand 1']
    #allocation5 [shape = 's32[2]{0}', space=sflag, size = 0x8, scoped, tag = 'scoped memory for tpu_custom_call.1']
    %15 = vsyncpa [#allocation3], 0
    %s16 = scalar_lea.sflag [#allocation3], 1
    %17 = vsyncpa %s16, 0
    %18 = vsyncpa [#allocation5], 0
    %s19 = scalar_lea.sflag [#allocation5], 1
    %20 = vsyncpa %s19, 0
    loop: start=0, step=1, limit=4
    $region2: #{tpu_custom_call.1} parent=1 // loop_pre_header
      _
    $region3: #{tpu_custom_call.1} parent=1 // loop_header
      %s22 = sphi 0, %s26
      %p23 = scmp.ge.s32.totalorder %s22, 4
      %s29 = sphi 0, %s41
      %s30 = sphi 0, %s37
      %s31 = sphi 0, %s29
      %s32 = sphi 0, %s30
      %s33 = sphi 0, %s31
      %s34 = sphi 0, %s32
      %s46 = sphi 0, %s48
      %s49 = sphi 0, %s46
      %s50 = sphi 0, %s49
      %s66 = sphi 0, %s50
      %s70 = sphi 0, %s70
      %s72 = sphi 0, %s70
      %s73 = sphi 0, %s72
      %s87 = sphi 0, %s73
      %s91 = sphi 0, %s91
      %s93 = sphi 0, %s91
      %s94 = sphi 0, %s93
      %s108 = sphi 0, %s94
      %s112 = sphi 0, %s112
      %s114 = sphi 0, %s112
      %s115 = sphi 0, %s114
      %s129 = sphi 0, %s115
      %s133 = sphi 0, %s133
      %s135 = sphi 0, %s133
      %s136 = sphi 0, %s135
      %s150 = sphi 0, %s136
      %s154 = sphi 0, %s154
      %s156 = sphi 0, %s154
      %s157 = sphi 0, %s156
      %s171 = sphi 0, %s157
      %s175 = sphi 0, %s175
      %s177 = sphi 0, %s175
      %s178 = sphi 0, %s177
      %s192 = sphi 0, %s178
      %s196 = sphi 0, %s196
      %s198 = sphi 0, %s196
      %s199 = sphi 0, %s198
      %s213 = sphi 0, %s199
      %s221 = sphi 0, %s223
      %s224 = sphi 0, %s221
      %s225 = sphi 0, %s224
      %s241 = sphi 0, %s225
      %s249 = sphi 0, %s251
      %s252 = sphi 0, %s249
      %s253 = sphi 0, %s252
      %s269 = sphi 0, %s253
    $region4: #{tpu_custom_call.1} parent=1 // loop_header_branch
      %25 = sbr.rel (%p23) target = $region8
    $region5: #{tpu_custom_call.1} parent=1 // loop_body
      %s27 = ssub.s32 %s22, 1
      %s28 = ssub.s32 %s22, 2
      %s35 = sadd.s32 1, %s30
      %p36 = scmp.ge.s32.totalorder %s35, 1
      %s37 = scalar_select %p36, 0, %s35
      %s38 = sadd.s32 1, %s29
      %s39 = scalar_select %p36, %s38, %s29
      %p40 = scmp.ge.s32.totalorder %s39, 2
      %s41 = scalar_select %p40, 0, %s39
      %s42 = ssub.s32 %s29, %s41
      %s43 = ssub.s32 %s30, %s37
      %s44 = sor.u32 %s42, %s43
      %p45 = scmp.eq.s32.totalorder %s44, 0
      %s47 = sadd.s32 %s46, 1
      %s48 = scalar_select %p45, %s46, %s47
      %p51 = pneg %p45
      %p52 = scmp.eq.s32.totalorder %s22, 1
      %p53 = por %p51, %p52
      %p54 = scmp.ne.s32.totalorder %s46, %s49
      %p55 = scmp.eq.s32.totalorder %s22, 0
      %p56 = por %p54, %p55
      %p57 = scmp.ne.s32.totalorder %s46, %s49
      %p58 = scmp.eq.s32.totalorder %s27, 1
      %p59 = por %p57, %p58
      %p60 = scmp.ne.s32.totalorder %s49, %s50
      %p61 = scmp.eq.s32.totalorder %s27, 0
      %p62 = por %p60, %p61
      %p63 = scmp.ne.s32.totalorder %s49, %s50
      %p64 = scmp.eq.s32.totalorder %s28, 1
      %p65 = por %p63, %p64
      %p67 = scmp.ne.s32.totalorder %s50, %s66
      %p68 = scmp.eq.s32.totalorder %s28, 0
      %p69 = por %p67, %p68
      %s71 = sadd.s32 %s70, 1
      %p74 = scmp.eq.s32.totalorder %s22, 1
      %p75 = scmp.ne.s32.totalorder %s70, %s72
      %p76 = scmp.eq.s32.totalorder %s22, 0
      %p77 = por %p75, %p76
      %p78 = scmp.ne.s32.totalorder %s70, %s72
      %p79 = scmp.eq.s32.totalorder %s27, 1
      %p80 = por %p78, %p79
      %p81 = scmp.ne.s32.totalorder %s72, %s73
      %p82 = scmp.eq.s32.totalorder %s27, 0
      %p83 = por %p81, %p82
      %p84 = scmp.ne.s32.totalorder %s72, %s73
      %p85 = scmp.eq.s32.totalorder %s28, 1
      %p86 = por %p84, %p85
      %p88 = scmp.ne.s32.totalorder %s73, %s87
      %p89 = scmp.eq.s32.totalorder %s28, 0
      %p90 = por %p88, %p89
      %s92 = sadd.s32 %s91, 1
      %p95 = scmp.eq.s32.totalorder %s22, 1
      %p96 = scmp.ne.s32.totalorder %s91, %s93
      %p97 = scmp.eq.s32.totalorder %s22, 0
      %p98 = por %p96, %p97
      %p99 = scmp.ne.s32.totalorder %s91, %s93
      %p100 = scmp.eq.s32.totalorder %s27, 1
      %p101 = por %p99, %p100
      %p102 = scmp.ne.s32.totalorder %s93, %s94
      %p103 = scmp.eq.s32.totalorder %s27, 0
      %p104 = por %p102, %p103
      %p105 = scmp.ne.s32.totalorder %s93, %s94
      %p106 = scmp.eq.s32.totalorder %s28, 1
      %p107 = por %p105, %p106
      %p109 = scmp.ne.s32.totalorder %s94, %s108
      %p110 = scmp.eq.s32.totalorder %s28, 0
      %p111 = por %p109, %p110
      %s113 = sadd.s32 %s112, 1
      %p116 = scmp.eq.s32.totalorder %s22, 1
      %p117 = scmp.ne.s32.totalorder %s112, %s114
      %p118 = scmp.eq.s32.totalorder %s22, 0
      %p119 = por %p117, %p118
      %p120 = scmp.ne.s32.totalorder %s112, %s114
      %p121 = scmp.eq.s32.totalorder %s27, 1
      %p122 = por %p120, %p121
      %p123 = scmp.ne.s32.totalorder %s114, %s115
      %p124 = scmp.eq.s32.totalorder %s27, 0
      %p125 = por %p123, %p124
      %p126 = scmp.ne.s32.totalorder %s114, %s115
      %p127 = scmp.eq.s32.totalorder %s28, 1
      %p128 = por %p126, %p127
      %p130 = scmp.ne.s32.totalorder %s115, %s129
      %p131 = scmp.eq.s32.totalorder %s28, 0
      %p132 = por %p130, %p131
      %s134 = sadd.s32 %s133, 1
      %p137 = scmp.eq.s32.totalorder %s22, 1
      %p138 = scmp.ne.s32.totalorder %s133, %s135
      %p139 = scmp.eq.s32.totalorder %s22, 0
      %p140 = por %p138, %p139
      %p141 = scmp.ne.s32.totalorder %s133, %s135
      %p142 = scmp.eq.s32.totalorder %s27, 1
      %p143 = por %p141, %p142
      %p144 = scmp.ne.s32.totalorder %s135, %s136
      %p145 = scmp.eq.s32.totalorder %s27, 0
      %p146 = por %p144, %p145
      %p147 = scmp.ne.s32.totalorder %s135, %s136
      %p148 = scmp.eq.s32.totalorder %s28, 1
      %p149 = por %p147, %p148
      %p151 = scmp.ne.s32.totalorder %s136, %s150
      %p152 = scmp.eq.s32.totalorder %s28, 0
      %p153 = por %p151, %p152
      %s155 = sadd.s32 %s154, 1
      %p158 = scmp.eq.s32.totalorder %s22, 1
      %p159 = scmp.ne.s32.totalorder %s154, %s156
      %p160 = scmp.eq.s32.totalorder %s22, 0
      %p161 = por %p159, %p160
      %p162 = scmp.ne.s32.totalorder %s154, %s156
      %p163 = scmp.eq.s32.totalorder %s27, 1
      %p164 = por %p162, %p163
      %p165 = scmp.ne.s32.totalorder %s156, %s157
      %p166 = scmp.eq.s32.totalorder %s27, 0
      %p167 = por %p165, %p166
      %p168 = scmp.ne.s32.totalorder %s156, %s157
      %p169 = scmp.eq.s32.totalorder %s28, 1
      %p170 = por %p168, %p169
      %p172 = scmp.ne.s32.totalorder %s157, %s171
      %p173 = scmp.eq.s32.totalorder %s28, 0
      %p174 = por %p172, %p173
      %s176 = sadd.s32 %s175, 1
      %p179 = scmp.eq.s32.totalorder %s22, 1
      %p180 = scmp.ne.s32.totalorder %s175, %s177
      %p181 = scmp.eq.s32.totalorder %s22, 0
      %p182 = por %p180, %p181
      %p183 = scmp.ne.s32.totalorder %s175, %s177
      %p184 = scmp.eq.s32.totalorder %s27, 1
      %p185 = por %p183, %p184
      %p186 = scmp.ne.s32.totalorder %s177, %s178
      %p187 = scmp.eq.s32.totalorder %s27, 0
      %p188 = por %p186, %p187
      %p189 = scmp.ne.s32.totalorder %s177, %s178
      %p190 = scmp.eq.s32.totalorder %s28, 1
      %p191 = por %p189, %p190
      %p193 = scmp.ne.s32.totalorder %s178, %s192
      %p194 = scmp.eq.s32.totalorder %s28, 0
      %p195 = por %p193, %p194
      %s197 = sadd.s32 %s196, 1
      %p200 = scmp.eq.s32.totalorder %s22, 1
      %p201 = scmp.ne.s32.totalorder %s196, %s198
      %p202 = scmp.eq.s32.totalorder %s22, 0
      %p203 = por %p201, %p202
      %p204 = scmp.ne.s32.totalorder %s196, %s198
      %p205 = scmp.eq.s32.totalorder %s27, 1
      %p206 = por %p204, %p205
      %p207 = scmp.ne.s32.totalorder %s198, %s199
      %p208 = scmp.eq.s32.totalorder %s27, 0
      %p209 = por %p207, %p208
      %p210 = scmp.ne.s32.totalorder %s198, %s199
      %p211 = scmp.eq.s32.totalorder %s28, 1
      %p212 = por %p210, %p211
      %p214 = scmp.ne.s32.totalorder %s199, %s213
      %p215 = scmp.eq.s32.totalorder %s28, 0
      %p216 = por %p214, %p215
      %s217 = ssub.s32 %s29, %s41
      %s218 = ssub.s32 %s30, %s37
      %s219 = sor.u32 %s217, %s218
      %p220 = scmp.eq.s32.totalorder %s219, 0
      %s222 = sadd.s32 %s221, 1
      %s223 = scalar_select %p220, %s221, %s222
      %p226 = pneg %p220
      %p227 = scmp.eq.s32.totalorder %s22, 1
      %p228 = por %p226, %p227
      %p229 = scmp.ne.s32.totalorder %s221, %s224
      %p230 = scmp.eq.s32.totalorder %s22, 0
      %p231 = por %p229, %p230
      %p232 = scmp.ne.s32.totalorder %s221, %s224
      %p233 = scmp.eq.s32.totalorder %s27, 1
      %p234 = por %p232, %p233
      %p235 = scmp.ne.s32.totalorder %s224, %s225
      %p236 = scmp.eq.s32.totalorder %s27, 0
      %p237 = por %p235, %p236
      %p238 = scmp.ne.s32.totalorder %s224, %s225
      %p239 = scmp.eq.s32.totalorder %s28, 1
      %p240 = por %p238, %p239
      %p242 = scmp.ne.s32.totalorder %s225, %s241
      %p243 = scmp.eq.s32.totalorder %s28, 0
      %p244 = por %p242, %p243
      %s245 = ssub.s32 %s29, %s41
      %s246 = ssub.s32 %s30, %s37
      %s247 = sor.u32 %s245, %s246
      %p248 = scmp.eq.s32.totalorder %s247, 0
      %s250 = sadd.s32 %s249, 1
      %s251 = scalar_select %p248, %s249, %s250
      %p254 = pneg %p248
      %p255 = scmp.eq.s32.totalorder %s22, 1
      %p256 = por %p254, %p255
      %p257 = scmp.ne.s32.totalorder %s249, %s252
      %p258 = scmp.eq.s32.totalorder %s22, 0
      %p259 = por %p257, %p258
      %p260 = scmp.ne.s32.totalorder %s249, %s252
      %p261 = scmp.eq.s32.totalorder %s27, 1
      %p262 = por %p260, %p261
      %p263 = scmp.ne.s32.totalorder %s252, %s253
      %p264 = scmp.eq.s32.totalorder %s27, 0
      %p265 = por %p263, %p264
      %p266 = scmp.ne.s32.totalorder %s252, %s253
      %p267 = scmp.eq.s32.totalorder %s28, 1
      %p268 = por %p266, %p267
      %p270 = scmp.ne.s32.totalorder %s253, %s269
      %p271 = scmp.eq.s32.totalorder %s28, 0
      %p272 = por %p270, %p271
      %p273 = scmp.le.s32.totalorder 1, %s22
      %p274 = scmp.lt.s32.totalorder %s22, 3
      %p275 = pnand %p273, %p274
      %p276 = pneg %p275
      // Predicated region
      $region9: #{tpu_custom_call.1} parent=5 // pred_check
        _
      $region10: #{tpu_custom_call.1} parent=5 // pred_check_branch
        %278 = sbr.rel (%p275) target = $region12
      $region11: #{tpu_custom_call.1} parent=5 // pred_region
        %s279 = ssub.s32 %s22, 1
        // Predicated region
        $region13: #{tpu_custom_call.1} parent=11 // pred_check
          %p280 = pneg %p83
        $region14: #{tpu_custom_call.1} parent=11 // pred_check_branch
          %282 = sbr.rel (%p280) target = $region16
        $region15: #{tpu_custom_call.1} parent=11 // pred_region
          _
        $region16: #{tpu_custom_call.1} parent=11 // pred_fallthru
          _
        // Predicated region
        $region17: #{tpu_custom_call.1} parent=11 // pred_check
          %p283 = pneg %p104
        $region18: #{tpu_custom_call.1} parent=11 // pred_check_branch
          %285 = sbr.rel (%p283) target = $region20
        $region19: #{tpu_custom_call.1} parent=11 // pred_region
          _
        $region20: #{tpu_custom_call.1} parent=11 // pred_fallthru
          _
        // Predicated region
        $region21: #{tpu_custom_call.1} parent=11 // pred_check
          %p286 = pneg %p125
        $region22: #{tpu_custom_call.1} parent=11 // pred_check_branch
          %288 = sbr.rel (%p286) target = $region24
        $region23: #{tpu_custom_call.1} parent=11 // pred_region
          _
        $region24: #{tpu_custom_call.1} parent=11 // pred_fallthru
          _
        // Predicated region
        $region25: #{tpu_custom_call.1} parent=11 // pred_check
          %p289 = pneg %p146
        $region26: #{tpu_custom_call.1} parent=11 // pred_check_branch
          %291 = sbr.rel (%p289) target = $region28
        $region27: #{tpu_custom_call.1} parent=11 // pred_region
          _
        $region28: #{tpu_custom_call.1} parent=11 // pred_fallthru
          _
        // Predicated region
        $region29: #{tpu_custom_call.1} parent=11 // pred_check
          %p292 = pneg %p167
        $region30: #{tpu_custom_call.1} parent=11 // pred_check_branch
          %294 = sbr.rel (%p292) target = $region32
        $region31: #{tpu_custom_call.1} parent=11 // pred_region
          _
        $region32: #{tpu_custom_call.1} parent=11 // pred_fallthru
          _
        // Predicated region
        $region33: #{tpu_custom_call.1} parent=11 // pred_check
          %p295 = pneg %p188
        $region34: #{tpu_custom_call.1} parent=11 // pred_check_branch
          %297 = sbr.rel (%p295) target = $region36
        $region35: #{tpu_custom_call.1} parent=11 // pred_region
          _
        $region36: #{tpu_custom_call.1} parent=11 // pred_fallthru
          _
        // Predicated region
        $region37: #{tpu_custom_call.1} parent=11 // pred_check
          %p298 = pneg %p209
        $region38: #{tpu_custom_call.1} parent=11 // pred_check_branch
          %300 = sbr.rel (%p298) target = $region40
        $region39: #{tpu_custom_call.1} parent=11 // pred_region
          _
        $region40: #{tpu_custom_call.1} parent=11 // pred_fallthru
          _
      $region12: #{tpu_custom_call.1} parent=5 // pred_fallthru
        _
      %p301 = scmp.lt.s32.totalorder %s22, 2
      // Predicated region
      $region41: #{tpu_custom_call.1} parent=5 // pred_check
        %p302 = pneg %p301
      $region42: #{tpu_custom_call.1} parent=5 // pred_check_branch
        %304 = sbr.rel (%p302) target = $region44
      $region43: #{tpu_custom_call.1} parent=5 // pred_region
        // Predicated region
        $region45: #{tpu_custom_call.1} parent=43 // pred_check
          %p305 = pneg %p56
        $region46: #{tpu_custom_call.1} parent=43 // pred_check_branch
          %307 = sbr.rel (%p305) target = $region48
        $region47: #{tpu_custom_call.1} parent=43 // pred_region
          %s308 = smul.u32 32, %s30
          %p309 = scmp.lt.s32.totalorder %s29, 1
          %s310 = scalar_select %p309, %s29, 1
          %p311 = scmp.lt.s32.totalorder %s308, 31
          %s312 = scalar_select %p311, %s308, 31
          %s313 = smul.addr %s310, 32
          %s314 = sadd.s32 %s312, %s313
          %s315 = smul.addr %s314, 8
          %s316 = scalar_lea.vmem %s0, %s315
          %s317 = smul.u32 32, %s30
        $region48: #{tpu_custom_call.1} parent=43 // pred_fallthru
          _
      $region44: #{tpu_custom_call.1} parent=5 // pred_fallthru
        _
      %p318 = scmp.le.s32.totalorder 1, %s22
      %p319 = scmp.lt.s32.totalorder %s22, 3
      %p320 = pnand %p318, %p319
      %p321 = pneg %p320
      // Predicated region
      $region49: #{tpu_custom_call.1} parent=5 // pred_check
        _
      $region50: #{tpu_custom_call.1} parent=5 // pred_check_branch
        %323 = sbr.rel (%p320) target = $region52
      $region51: #{tpu_custom_call.1} parent=5 // pred_region
        %s324 = ssub.s32 %s22, 1
        %s325 = smul.u32 32, %s32
        %p326 = scmp.lt.s32.totalorder %s31, 1
        %s327 = scalar_select %p326, %s31, 1
        %p328 = scmp.lt.s32.totalorder %s325, 31
        %s329 = scalar_select %p328, %s325, 31
        %s330 = smul.addr %s327, 32
        %s331 = sadd.s32 %s329, %s330
        %s332 = smul.addr %s331, 8
        %s333 = scalar_lea.vmem %s0, %s332
        %p334 = pneg %p62
        %p335 = pneg %p59
        %p336 = pneg %p83
        %p337 = pneg %p80
        %p338 = pneg %p104
        %p339 = pneg %p101
        %p340 = pneg %p125
        %p341 = pneg %p122
        %p342 = pneg %p146
        %p343 = pneg %p143
        %p344 = pneg %p167
        %p345 = pneg %p164
        %p346 = pneg %p188
        %p347 = pneg %p185
        %p348 = pneg %p209
        %p349 = pneg %p206
        %p350 = pneg %p237
        %p351 = pneg %p234
        %s352 = sand.u32 %s224, 1
        %s353 = scalar_lea.sflag [#allocation3], %s352
        %s354 = sand.u32 %s224, 1
        %s355 = smul.addr %s354, 256
        %s356 = scalar_lea.vmem [#allocation2], %s355
        %p357 = pneg %p265
        %p358 = pneg %p262
        %s359 = sand.u32 %s252, 1
        %s360 = scalar_lea.sflag [#allocation5], %s359
        %s361 = sand.u32 %s252, 1
        %s362 = smul.addr %s361, 256
        %s363 = scalar_lea.vmem [#allocation4], %s362
        %s364 = smul.u32 32, %s32
        %p365 = scmp.lt.s32.totalorder %s31, 1
        %s366 = scalar_select %p365, %s31, 1
        %p367 = scmp.lt.s32.totalorder %s364, 31
        %s368 = scalar_select %p367, %s364, 31
        %s369 = smul.addr %s366, 32
        %s370 = sadd.s32 %s368, %s369
        %s371 = smul.addr %s370, 8
        %s372 = scalar_lea.vmem %s0, %s371
        %s373 = smul.u32 32, %s32
        %s374 = smul.u32 2, %s32
        %s375 = smul.u32 32, %s32
        %v377 = vld [vmem:[%s372] sm:$0xff]
        %v378 = vld [vmem:[%s372 + $0x8] sm:$0xff]
        %v379 = vld [vmem:[%s372 + $0x10] sm:$0xff]
        %v380 = vld [vmem:[%s372 + $0x18] sm:$0xff]
        %v381 = vld [vmem:[%s372 + $0x20] sm:$0xff]
        %v382 = vld [vmem:[%s372 + $0x28] sm:$0xff]
        %v383 = vld [vmem:[%s372 + $0x30] sm:$0xff]
        %v384 = vld [vmem:[%s372 + $0x38] sm:$0xff]
        %v385 = vld [vmem:[%s372 + $0x40] sm:$0xff]
        %v386 = vld [vmem:[%s372 + $0x48] sm:$0xff]
        %v387 = vld [vmem:[%s372 + $0x50] sm:$0xff]
        %v388 = vld [vmem:[%s372 + $0x58] sm:$0xff]
        %v389 = vld [vmem:[%s372 + $0x60] sm:$0xff]
        %v390 = vld [vmem:[%s372 + $0x68] sm:$0xff]
        %v391 = vld [vmem:[%s372 + $0x70] sm:$0xff]
        %v392 = vld [vmem:[%s372 + $0x78] sm:$0xff]
        %v393 = vld [vmem:[%s372 + $0x80] sm:$0xff]
        %v394 = vld [vmem:[%s372 + $0x88] sm:$0xff]
        %v395 = vld [vmem:[%s372 + $0x90] sm:$0xff]
        %v396 = vld [vmem:[%s372 + $0x98] sm:$0xff]
        %v397 = vld [vmem:[%s372 + $0xa0] sm:$0xff]
        %v398 = vld [vmem:[%s372 + $0xa8] sm:$0xff]
        %v399 = vld [vmem:[%s372 + $0xb0] sm:$0xff]
        %v400 = vld [vmem:[%s372 + $0xb8] sm:$0xff]
        %v401 = vld [vmem:[%s372 + $0xc0] sm:$0xff]
        %v402 = vld [vmem:[%s372 + $0xc8] sm:$0xff]
        %v403 = vld [vmem:[%s372 + $0xd0] sm:$0xff]
        %v404 = vld [vmem:[%s372 + $0xd8] sm:$0xff]
        %v405 = vld [vmem:[%s372 + $0xe0] sm:$0xff]
        %v406 = vld [vmem:[%s372 + $0xe8] sm:$0xff]
        %v407 = vld [vmem:[%s372 + $0xf0] sm:$0xff]
        %v408 = vld [vmem:[%s372 + $0xf8] sm:$0xff]
        %v409 = vld [vmem:[%s1] sm:$0xff]
        %411 = vset.pattern.permute.xlu0 0
        %412 = vperm.xlu0 %411, %v377
        %v413 = vpop.permute.xlu0 %412
        %416 = vset.pattern.permute.xlu0 0
        %417 = vperm.xlu0 %416, %v378
        %v418 = vpop.permute.xlu0 %417
        %421 = vset.pattern.permute.xlu0 0
        %422 = vperm.xlu0 %421, %v379
        %v423 = vpop.permute.xlu0 %422
        %426 = vset.pattern.permute.xlu0 0
        %427 = vperm.xlu0 %426, %v380
        %v428 = vpop.permute.xlu0 %427
        %431 = vset.pattern.permute.xlu0 0
        %432 = vperm.xlu0 %431, %v381
        %v433 = vpop.permute.xlu0 %432
        %436 = vset.pattern.permute.xlu0 0
        %437 = vperm.xlu0 %436, %v382
        %v438 = vpop.permute.xlu0 %437
        %441 = vset.pattern.permute.xlu0 0
        %442 = vperm.xlu0 %441, %v383
        %v443 = vpop.permute.xlu0 %442
        %446 = vset.pattern.permute.xlu0 0
        %447 = vperm.xlu0 %446, %v384
        %v448 = vpop.permute.xlu0 %447
        %451 = vset.pattern.permute.xlu0 0
        %452 = vperm.xlu0 %451, %v385
        %v453 = vpop.permute.xlu0 %452
        %456 = vset.pattern.permute.xlu0 0
        %457 = vperm.xlu0 %456, %v386
        %v458 = vpop.permute.xlu0 %457
        %461 = vset.pattern.permute.xlu0 0
        %462 = vperm.xlu0 %461, %v387
        %v463 = vpop.permute.xlu0 %462
        %466 = vset.pattern.permute.xlu0 0
        %467 = vperm.xlu0 %466, %v388
        %v468 = vpop.permute.xlu0 %467
        %471 = vset.pattern.permute.xlu0 0
        %472 = vperm.xlu0 %471, %v389
        %v473 = vpop.permute.xlu0 %472
        %476 = vset.pattern.permute.xlu0 0
        %477 = vperm.xlu0 %476, %v390
        %v478 = vpop.permute.xlu0 %477
        %481 = vset.pattern.permute.xlu0 0
        %482 = vperm.xlu0 %481, %v391
        %v483 = vpop.permute.xlu0 %482
        %486 = vset.pattern.permute.xlu0 0
        %487 = vperm.xlu0 %486, %v392
        %v488 = vpop.permute.xlu0 %487
        %491 = vset.pattern.permute.xlu0 0
        %492 = vperm.xlu0 %491, %v393
        %v493 = vpop.permute.xlu0 %492
        %496 = vset.pattern.permute.xlu0 0
        %497 = vperm.xlu0 %496, %v394
        %v498 = vpop.permute.xlu0 %497
        %501 = vset.pattern.permute.xlu0 0
        %502 = vperm.xlu0 %501, %v395
        %v503 = vpop.permute.xlu0 %502
        %506 = vset.pattern.permute.xlu0 0
        %507 = vperm.xlu0 %506, %v396
        %v508 = vpop.permute.xlu0 %507
        %511 = vset.pattern.permute.xlu0 0
        %512 = vperm.xlu0 %511, %v397
        %v513 = vpop.permute.xlu0 %512
        %516 = vset.pattern.permute.xlu0 0
        %517 = vperm.xlu0 %516, %v398
        %v518 = vpop.permute.xlu0 %517
        %521 = vset.pattern.permute.xlu0 0
        %522 = vperm.xlu0 %521, %v399
        %v523 = vpop.permute.xlu0 %522
        %526 = vset.pattern.permute.xlu0 0
        %527 = vperm.xlu0 %526, %v400
        %v528 = vpop.permute.xlu0 %527
        %531 = vset.pattern.permute.xlu0 0
        %532 = vperm.xlu0 %531, %v401
        %v533 = vpop.permute.xlu0 %532
        %536 = vset.pattern.permute.xlu0 0
        %537 = vperm.xlu0 %536, %v402
        %v538 = vpop.permute.xlu0 %537
        %541 = vset.pattern.permute.xlu0 0
        %542 = vperm.xlu0 %541, %v403
        %v543 = vpop.permute.xlu0 %542
        %546 = vset.pattern.permute.xlu0 0
        %547 = vperm.xlu0 %546, %v404
        %v548 = vpop.permute.xlu0 %547
        %551 = vset.pattern.permute.xlu0 0
        %552 = vperm.xlu0 %551, %v405
        %v553 = vpop.permute.xlu0 %552
        %556 = vset.pattern.permute.xlu0 0
        %557 = vperm.xlu0 %556, %v406
        %v558 = vpop.permute.xlu0 %557
        %561 = vset.pattern.permute.xlu0 0
        %562 = vperm.xlu0 %561, %v407
        %v563 = vpop.permute.xlu0 %562
        %566 = vset.pattern.permute.xlu0 0
        %567 = vperm.xlu0 %566, %v408
        %v568 = vpop.permute.xlu0 %567
        %v570 = vperm.slane %v409, 0
        %v571 = vmul.f32 %v413, %v570
        %v572 = vmul.f32 %v418, %v570
        %v573 = vmul.f32 %v423, %v570
        %v574 = vmul.f32 %v428, %v570
        %v575 = vmul.f32 %v433, %v570
        %v576 = vmul.f32 %v438, %v570
        %v577 = vmul.f32 %v443, %v570
        %v578 = vmul.f32 %v448, %v570
        %v579 = vmul.f32 %v453, %v570
        %v580 = vmul.f32 %v458, %v570
        %v581 = vmul.f32 %v463, %v570
        %v582 = vmul.f32 %v468, %v570
        %v583 = vmul.f32 %v473, %v570
        %v584 = vmul.f32 %v478, %v570
        %v585 = vmul.f32 %v483, %v570
        %v586 = vmul.f32 %v488, %v570
        %v587 = vmul.f32 %v493, %v570
        %v588 = vmul.f32 %v498, %v570
        %v589 = vmul.f32 %v503, %v570
        %v590 = vmul.f32 %v508, %v570
        %v591 = vmul.f32 %v513, %v570
        %v592 = vmul.f32 %v518, %v570
        %v593 = vmul.f32 %v523, %v570
        %v594 = vmul.f32 %v528, %v570
        %v595 = vmul.f32 %v533, %v570
        %v596 = vmul.f32 %v538, %v570
        %v597 = vmul.f32 %v543, %v570
        %v598 = vmul.f32 %v548, %v570
        %v599 = vmul.f32 %v553, %v570
        %v600 = vmul.f32 %v558, %v570
        %v601 = vmul.f32 %v563, %v570
        %v602 = vmul.f32 %v568, %v570
        %603 = vset.pattern.permute.xlu0 1
        %604 = vperm.xlu0 %603, %v377
        %v605 = vpop.permute.xlu0 %604
        %607 = vset.pattern.permute.xlu0 1
        %608 = vperm.xlu0 %607, %v378
        %v609 = vpop.permute.xlu0 %608
        %611 = vset.pattern.permute.xlu0 1
        %612 = vperm.xlu0 %611, %v379
        %v613 = vpop.permute.xlu0 %612
        %615 = vset.pattern.permute.xlu0 1
        %616 = vperm.xlu0 %615, %v380
        %v617 = vpop.permute.xlu0 %616
        %619 = vset.pattern.permute.xlu0 1
        %620 = vperm.xlu0 %619, %v381
        %v621 = vpop.permute.xlu0 %620
        %623 = vset.pattern.permute.xlu0 1
        %624 = vperm.xlu0 %623, %v382
        %v625 = vpop.permute.xlu0 %624
        %627 = vset.pattern.permute.xlu0 1
        %628 = vperm.xlu0 %627, %v383
        %v629 = vpop.permute.xlu0 %628
        %631 = vset.pattern.permute.xlu0 1
        %632 = vperm.xlu0 %631, %v384
        %v633 = vpop.permute.xlu0 %632
        %635 = vset.pattern.permute.xlu0 1
        %636 = vperm.xlu0 %635, %v385
        %v637 = vpop.permute.xlu0 %636
        %639 = vset.pattern.permute.xlu0 1
        %640 = vperm.xlu0 %639, %v386
        %v641 = vpop.permute.xlu0 %640
        %643 = vset.pattern.permute.xlu0 1
        %644 = vperm.xlu0 %643, %v387
        %v645 = vpop.permute.xlu0 %644
        %647 = vset.pattern.permute.xlu0 1
        %648 = vperm.xlu0 %647, %v388
        %v649 = vpop.permute.xlu0 %648
        %651 = vset.pattern.permute.xlu0 1
        %652 = vperm.xlu0 %651, %v389
        %v653 = vpop.permute.xlu0 %652
        %655 = vset.pattern.permute.xlu0 1
        %656 = vperm.xlu0 %655, %v390
        %v657 = vpop.permute.xlu0 %656
        %659 = vset.pattern.permute.xlu0 1
        %660 = vperm.xlu0 %659, %v391
        %v661 = vpop.permute.xlu0 %660
        %663 = vset.pattern.permute.xlu0 1
        %664 = vperm.xlu0 %663, %v392
        %v665 = vpop.permute.xlu0 %664
        %667 = vset.pattern.permute.xlu0 1
        %668 = vperm.xlu0 %667, %v393
        %v669 = vpop.permute.xlu0 %668
        %671 = vset.pattern.permute.xlu0 1
        %672 = vperm.xlu0 %671, %v394
        %v673 = vpop.permute.xlu0 %672
        %675 = vset.pattern.permute.xlu0 1
        %676 = vperm.xlu0 %675, %v395
        %v677 = vpop.permute.xlu0 %676
        %679 = vset.pattern.permute.xlu0 1
        %680 = vperm.xlu0 %679, %v396
        %v681 = vpop.permute.xlu0 %680
        %683 = vset.pattern.permute.xlu0 1
        %684 = vperm.xlu0 %683, %v397
        %v685 = vpop.permute.xlu0 %684
        %687 = vset.pattern.permute.xlu0 1
        %688 = vperm.xlu0 %687, %v398
        %v689 = vpop.permute.xlu0 %688
        %691 = vset.pattern.permute.xlu0 1
        %692 = vperm.xlu0 %691, %v399
        %v693 = vpop.permute.xlu0 %692
        %695 = vset.pattern.permute.xlu0 1
        %696 = vperm.xlu0 %695, %v400
        %v697 = vpop.permute.xlu0 %696
        %699 = vset.pattern.permute.xlu0 1
        %700 = vperm.xlu0 %699, %v401
        %v701 = vpop.permute.xlu0 %700
        %703 = vset.pattern.permute.xlu0 1
        %704 = vperm.xlu0 %703, %v402
        %v705 = vpop.permute.xlu0 %704
        %707 = vset.pattern.permute.xlu0 1
        %708 = vperm.xlu0 %707, %v403
        %v709 = vpop.permute.xlu0 %708
        %711 = vset.pattern.permute.xlu0 1
        %712 = vperm.xlu0 %711, %v404
        %v713 = vpop.permute.xlu0 %712
        %715 = vset.pattern.permute.xlu0 1
        %716 = vperm.xlu0 %715, %v405
        %v717 = vpop.permute.xlu0 %716
        %719 = vset.pattern.permute.xlu0 1
        %720 = vperm.xlu0 %719, %v406
        %v721 = vpop.permute.xlu0 %720
        %723 = vset.pattern.permute.xlu0 1
        %724 = vperm.xlu0 %723, %v407
        %v725 = vpop.permute.xlu0 %724
        %727 = vset.pattern.permute.xlu0 1
        %728 = vperm.xlu0 %727, %v408
        %v729 = vpop.permute.xlu0 %728
        %v731 = vperm.slane %v409, 1
        %v732 = vmul.f32 %v605, %v731
        %v733 = vmul.f32 %v609, %v731
        %v734 = vmul.f32 %v613, %v731
        %v735 = vmul.f32 %v617, %v731
        %v736 = vmul.f32 %v621, %v731
        %v737 = vmul.f32 %v625, %v731
        %v738 = vmul.f32 %v629, %v731
        %v739 = vmul.f32 %v633, %v731
        %v740 = vmul.f32 %v637, %v731
        %v741 = vmul.f32 %v641, %v731
        %v742 = vmul.f32 %v645, %v731
        %v743 = vmul.f32 %v649, %v731
        %v744 = vmul.f32 %v653, %v731
        %v745 = vmul.f32 %v657, %v731
        %v746 = vmul.f32 %v661, %v731
        %v747 = vmul.f32 %v665, %v731
        %v748 = vmul.f32 %v669, %v731
        %v749 = vmul.f32 %v673, %v731
        %v750 = vmul.f32 %v677, %v731
        %v751 = vmul.f32 %v681, %v731
        %v752 = vmul.f32 %v685, %v731
        %v753 = vmul.f32 %v689, %v731
        %v754 = vmul.f32 %v693, %v731
        %v755 = vmul.f32 %v697, %v731
        %v756 = vmul.f32 %v701, %v731
        %v757 = vmul.f32 %v705, %v731
        %v758 = vmul.f32 %v709, %v731
        %v759 = vmul.f32 %v713, %v731
        %v760 = vmul.f32 %v717, %v731
        %v761 = vmul.f32 %v721, %v731
        %v762 = vmul.f32 %v725, %v731
        %v763 = vmul.f32 %v729, %v731
        %v764 = vadd.f32 %v571, %v732
        %v765 = vadd.f32 %v572, %v733
        %v766 = vadd.f32 %v573, %v734
        %v767 = vadd.f32 %v574, %v735
        %v768 = vadd.f32 %v575, %v736
        %v769 = vadd.f32 %v576, %v737
        %v770 = vadd.f32 %v577, %v738
        %v771 = vadd.f32 %v578, %v739
        %v772 = vadd.f32 %v579, %v740
        %v773 = vadd.f32 %v580, %v741
        %v774 = vadd.f32 %v581, %v742
        %v775 = vadd.f32 %v582, %v743
        %v776 = vadd.f32 %v583, %v744
        %v777 = vadd.f32 %v584, %v745
        %v778 = vadd.f32 %v585, %v746
        %v779 = vadd.f32 %v586, %v747
        %v780 = vadd.f32 %v587, %v748
        %v781 = vadd.f32 %v588, %v749
        %v782 = vadd.f32 %v589, %v750
        %v783 = vadd.f32 %v590, %v751
        %v784 = vadd.f32 %v591, %v752
        %v785 = vadd.f32 %v592, %v753
        %v786 = vadd.f32 %v593, %v754
        %v787 = vadd.f32 %v594, %v755
        %v788 = vadd.f32 %v595, %v756
        %v789 = vadd.f32 %v596, %v757
        %v790 = vadd.f32 %v597, %v758
        %v791 = vadd.f32 %v598, %v759
        %v792 = vadd.f32 %v599, %v760
        %v793 = vadd.f32 %v600, %v761
        %v794 = vadd.f32 %v601, %v762
        %v795 = vadd.f32 %v602, %v763
        %796 = vset.pattern.permute.xlu0 2
        %797 = vperm.xlu0 %796, %v377
        %v798 = vpop.permute.xlu0 %797
        %800 = vset.pattern.permute.xlu0 2
        %801 = vperm.xlu0 %800, %v378
        %v802 = vpop.permute.xlu0 %801
        %804 = vset.pattern.permute.xlu0 2
        %805 = vperm.xlu0 %804, %v379
        %v806 = vpop.permute.xlu0 %805
        %808 = vset.pattern.permute.xlu0 2
        %809 = vperm.xlu0 %808, %v380
        %v810 = vpop.permute.xlu0 %809
        %812 = vset.pattern.permute.xlu0 2
        %813 = vperm.xlu0 %812, %v381
        %v814 = vpop.permute.xlu0 %813
        %816 = vset.pattern.permute.xlu0 2
        %817 = vperm.xlu0 %816, %v382
        %v818 = vpop.permute.xlu0 %817
        %820 = vset.pattern.permute.xlu0 2
        %821 = vperm.xlu0 %820, %v383
        %v822 = vpop.permute.xlu0 %821
        %824 = vset.pattern.permute.xlu0 2
        %825 = vperm.xlu0 %824, %v384
        %v826 = vpop.permute.xlu0 %825
        %828 = vset.pattern.permute.xlu0 2
        %829 = vperm.xlu0 %828, %v385
        %v830 = vpop.permute.xlu0 %829
        %832 = vset.pattern.permute.xlu0 2
        %833 = vperm.xlu0 %832, %v386
        %v834 = vpop.permute.xlu0 %833
        %836 = vset.pattern.permute.xlu0 2
        %837 = vperm.xlu0 %836, %v387
        %v838 = vpop.permute.xlu0 %837
        %840 = vset.pattern.permute.xlu0 2
        %841 = vperm.xlu0 %840, %v388
        %v842 = vpop.permute.xlu0 %841
        %844 = vset.pattern.permute.xlu0 2
        %845 = vperm.xlu0 %844, %v389
        %v846 = vpop.permute.xlu0 %845
        %848 = vset.pattern.permute.xlu0 2
        %849 = vperm.xlu0 %848, %v390
        %v850 = vpop.permute.xlu0 %849
        %852 = vset.pattern.permute.xlu0 2
        %853 = vperm.xlu0 %852, %v391
        %v854 = vpop.permute.xlu0 %853
        %856 = vset.pattern.permute.xlu0 2
        %857 = vperm.xlu0 %856, %v392
        %v858 = vpop.permute.xlu0 %857
        %860 = vset.pattern.permute.xlu0 2
        %861 = vperm.xlu0 %860, %v393
        %v862 = vpop.permute.xlu0 %861
        %864 = vset.pattern.permute.xlu0 2
        %865 = vperm.xlu0 %864, %v394
        %v866 = vpop.permute.xlu0 %865
        %868 = vset.pattern.permute.xlu0 2
        %869 = vperm.xlu0 %868, %v395
        %v870 = vpop.permute.xlu0 %869
        %872 = vset.pattern.permute.xlu0 2
        %873 = vperm.xlu0 %872, %v396
        %v874 = vpop.permute.xlu0 %873
        %876 = vset.pattern.permute.xlu0 2
        %877 = vperm.xlu0 %876, %v397
        %v878 = vpop.permute.xlu0 %877
        %880 = vset.pattern.permute.xlu0 2
        %881 = vperm.xlu0 %880, %v398
        %v882 = vpop.permute.xlu0 %881
        %884 = vset.pattern.permute.xlu0 2
        %885 = vperm.xlu0 %884, %v399
        %v886 = vpop.permute.xlu0 %885
        %888 = vset.pattern.permute.xlu0 2
        %889 = vperm.xlu0 %888, %v400
        %v890 = vpop.permute.xlu0 %889
        %892 = vset.pattern.permute.xlu0 2
        %893 = vperm.xlu0 %892, %v401
        %v894 = vpop.permute.xlu0 %893
        %896 = vset.pattern.permute.xlu0 2
        %897 = vperm.xlu0 %896, %v402
        %v898 = vpop.permute.xlu0 %897
        %900 = vset.pattern.permute.xlu0 2
        %901 = vperm.xlu0 %900, %v403
        %v902 = vpop.permute.xlu0 %901
        %904 = vset.pattern.permute.xlu0 2
        %905 = vperm.xlu0 %904, %v404
        %v906 = vpop.permute.xlu0 %905
        %908 = vset.pattern.permute.xlu0 2
        %909 = vperm.xlu0 %908, %v405
        %v910 = vpop.permute.xlu0 %909
        %912 = vset.pattern.permute.xlu0 2
        %913 = vperm.xlu0 %912, %v406
        %v914 = vpop.permute.xlu0 %913
        %916 = vset.pattern.permute.xlu0 2
        %917 = vperm.xlu0 %916, %v407
        %v918 = vpop.permute.xlu0 %917
        %920 = vset.pattern.permute.xlu0 2
        %921 = vperm.xlu0 %920, %v408
        %v922 = vpop.permute.xlu0 %921
        %v924 = vperm.slane %v409, 2
        %v925 = vmul.f32 %v798, %v924
        %v926 = vmul.f32 %v802, %v924
        %v927 = vmul.f32 %v806, %v924
        %v928 = vmul.f32 %v810, %v924
        %v929 = vmul.f32 %v814, %v924
        %v930 = vmul.f32 %v818, %v924
        %v931 = vmul.f32 %v822, %v924
        %v932 = vmul.f32 %v826, %v924
        %v933 = vmul.f32 %v830, %v924
        %v934 = vmul.f32 %v834, %v924
        %v935 = vmul.f32 %v838, %v924
        %v936 = vmul.f32 %v842, %v924
        %v937 = vmul.f32 %v846, %v924
        %v938 = vmul.f32 %v850, %v924
        %v939 = vmul.f32 %v854, %v924
        %v940 = vmul.f32 %v858, %v924
        %v941 = vmul.f32 %v862, %v924
        %v942 = vmul.f32 %v866, %v924
        %v943 = vmul.f32 %v870, %v924
        %v944 = vmul.f32 %v874, %v924
        %v945 = vmul.f32 %v878, %v924
        %v946 = vmul.f32 %v882, %v924
        %v947 = vmul.f32 %v886, %v924
        %v948 = vmul.f32 %v890, %v924
        %v949 = vmul.f32 %v894, %v924
        %v950 = vmul.f32 %v898, %v924
        %v951 = vmul.f32 %v902, %v924
        %v952 = vmul.f32 %v906, %v924
        %v953 = vmul.f32 %v910, %v924
        %v954 = vmul.f32 %v914, %v924
        %v955 = vmul.f32 %v918, %v924
        %v956 = vmul.f32 %v922, %v924
        %v957 = vadd.f32 %v764, %v925
        %v958 = vadd.f32 %v765, %v926
        %v959 = vadd.f32 %v766, %v927
        %v960 = vadd.f32 %v767, %v928
        %v961 = vadd.f32 %v768, %v929
        %v962 = vadd.f32 %v769, %v930
        %v963 = vadd.f32 %v770, %v931
        %v964 = vadd.f32 %v771, %v932
        %v965 = vadd.f32 %v772, %v933
        %v966 = vadd.f32 %v773, %v934
        %v967 = vadd.f32 %v774, %v935
        %v968 = vadd.f32 %v775, %v936
        %v969 = vadd.f32 %v776, %v937
        %v970 = vadd.f32 %v777, %v938
        %v971 = vadd.f32 %v778, %v939
        %v972 = vadd.f32 %v779, %v940
        %v973 = vadd.f32 %v780, %v941
        %v974 = vadd.f32 %v781, %v942
        %v975 = vadd.f32 %v782, %v943
        %v976 = vadd.f32 %v783, %v944
        %v977 = vadd.f32 %v784, %v945
        %v978 = vadd.f32 %v785, %v946
        %v979 = vadd.f32 %v786, %v947
        %v980 = vadd.f32 %v787, %v948
        %v981 = vadd.f32 %v788, %v949
        %v982 = vadd.f32 %v789, %v950
        %v983 = vadd.f32 %v790, %v951
        %v984 = vadd.f32 %v791, %v952
        %v985 = vadd.f32 %v792, %v953
        %v986 = vadd.f32 %v793, %v954
        %v987 = vadd.f32 %v794, %v955
        %v988 = vadd.f32 %v795, %v956
        %v989 = vperm.slane %v409, 3
        %v990 = vadd.f32 %v957, %v989
        %v991 = vadd.f32 %v958, %v989
        %v992 = vadd.f32 %v959, %v989
        %v993 = vadd.f32 %v960, %v989
        %v994 = vadd.f32 %v961, %v989
        %v995 = vadd.f32 %v962, %v989
        %v996 = vadd.f32 %v963, %v989
        %v997 = vadd.f32 %v964, %v989
        %v998 = vadd.f32 %v965, %v989
        %v999 = vadd.f32 %v966, %v989
        %v1000 = vadd.f32 %v967, %v989
        %v1001 = vadd.f32 %v968, %v989
        %v1002 = vadd.f32 %v969, %v989
        %v1003 = vadd.f32 %v970, %v989
        %v1004 = vadd.f32 %v971, %v989
        %v1005 = vadd.f32 %v972, %v989
        %v1006 = vadd.f32 %v973, %v989
        %v1007 = vadd.f32 %v974, %v989
        %v1008 = vadd.f32 %v975, %v989
        %v1009 = vadd.f32 %v976, %v989
        %v1010 = vadd.f32 %v977, %v989
        %v1011 = vadd.f32 %v978, %v989
        %v1012 = vadd.f32 %v979, %v989
        %v1013 = vadd.f32 %v980, %v989
        %v1014 = vadd.f32 %v981, %v989
        %v1015 = vadd.f32 %v982, %v989
        %v1016 = vadd.f32 %v983, %v989
        %v1017 = vadd.f32 %v984, %v989
        %v1018 = vadd.f32 %v985, %v989
        %v1019 = vadd.f32 %v986, %v989
        %v1020 = vadd.f32 %v987, %v989
        %v1021 = vadd.f32 %v988, %v989
        %v1022 = vmax.f32 %v990, 0.0
        %v1023 = vmax.f32 %v991, 0.0
        %v1024 = vmax.f32 %v992, 0.0
        %v1025 = vmax.f32 %v993, 0.0
        %v1026 = vmax.f32 %v994, 0.0
        %v1027 = vmax.f32 %v995, 0.0
        %v1028 = vmax.f32 %v996, 0.0
        %v1029 = vmax.f32 %v997, 0.0
        %v1030 = vmax.f32 %v998, 0.0
        %v1031 = vmax.f32 %v999, 0.0
        %v1032 = vmax.f32 %v1000, 0.0
        %v1033 = vmax.f32 %v1001, 0.0
        %v1034 = vmax.f32 %v1002, 0.0
        %v1035 = vmax.f32 %v1003, 0.0
        %v1036 = vmax.f32 %v1004, 0.0
        %v1037 = vmax.f32 %v1005, 0.0
        %v1038 = vmax.f32 %v1006, 0.0
        %v1039 = vmax.f32 %v1007, 0.0
        %v1040 = vmax.f32 %v1008, 0.0
        %v1041 = vmax.f32 %v1009, 0.0
        %v1042 = vmax.f32 %v1010, 0.0
        %v1043 = vmax.f32 %v1011, 0.0
        %v1044 = vmax.f32 %v1012, 0.0
        %v1045 = vmax.f32 %v1013, 0.0
        %v1046 = vmax.f32 %v1014, 0.0
        %v1047 = vmax.f32 %v1015, 0.0
        %v1048 = vmax.f32 %v1016, 0.0
        %v1049 = vmax.f32 %v1017, 0.0
        %v1050 = vmax.f32 %v1018, 0.0
        %v1051 = vmax.f32 %v1019, 0.0
        %v1052 = vmax.f32 %v1020, 0.0
        %v1053 = vmax.f32 %v1021, 0.0
        %v1054 = vpack.c.bf16 %v1023, %v1022
        %v1055 = vpack.c.bf16 %v1025, %v1024
        %v1056 = vpack.c.bf16 %v1027, %v1026
        %v1057 = vpack.c.bf16 %v1029, %v1028
        %v1058 = vpack.c.bf16 %v1031, %v1030
        %v1059 = vpack.c.bf16 %v1033, %v1032
        %v1060 = vpack.c.bf16 %v1035, %v1034
        %v1061 = vpack.c.bf16 %v1037, %v1036
        %v1062 = vpack.c.bf16 %v1039, %v1038
        %v1063 = vpack.c.bf16 %v1041, %v1040
        %v1064 = vpack.c.bf16 %v1043, %v1042
        %v1065 = vpack.c.bf16 %v1045, %v1044
        %v1066 = vpack.c.bf16 %v1047, %v1046
        %v1067 = vpack.c.bf16 %v1049, %v1048
        %v1068 = vpack.c.bf16 %v1051, %v1050
        %v1069 = vpack.c.bf16 %v1053, %v1052
        %v1070 = vld [vmem:[%s2] sm:$0xf]
        %v1071 = vld [vmem:[%s2 + $0x4] sm:$0xf]
        %v1072 = vld [vmem:[%s2 + $0x8] sm:$0xf]
        %v1073 = vld [vmem:[%s2 + $0xc] sm:$0xf]
        %v1074 = vld [vmem:[%s2 + $0x10] sm:$0xf]
        %v1075 = vld [vmem:[%s2 + $0x14] sm:$0xf]
        %v1076 = vld [vmem:[%s2 + $0x18] sm:$0xf]
        %v1077 = vld [vmem:[%s2 + $0x1c] sm:$0xf]
        %v1078 = vld [vmem:[%s3] sm:$0x1]
        %v1080 = vperm.slane %v1078, 0
        %v1090 = vunpack.c.l.b16 %v1070
        %v1091 = vunpack.c.l.b16 %v1071
        %v1092 = vunpack.c.l.b16 %v1072
        %v1093 = vunpack.c.l.b16 %v1073
        %v1094 = vunpack.c.l.b16 %v1074
        %v1095 = vunpack.c.l.b16 %v1075
        %v1096 = vunpack.c.l.b16 %v1076
        %v1097 = vunpack.c.l.b16 %v1077
        %v1098 = vpack.c.b16 %v1091, %v1090
        %v1099 = vpack.c.b16 %v1093, %v1092
        %v1100 = vpack.c.b16 %v1095, %v1094
        %v1101 = vpack.c.b16 %v1097, %v1096
        %vm1106 = vcmask 523264
        %v1108 = vsel %vm1106, %v1054, 0
        %v1111 = vsel %vm1106, %v1055, 0
        %v1114 = vsel %vm1106, %v1056, 0
        %v1117 = vsel %vm1106, %v1057, 0
        %v1120 = vsel %vm1106, %v1058, 0
        %v1123 = vsel %vm1106, %v1059, 0
        %v1126 = vsel %vm1106, %v1060, 0
        %v1129 = vsel %vm1106, %v1061, 0
        %v1132 = vsel %vm1106, %v1062, 0
        %v1135 = vsel %vm1106, %v1063, 0
        %v1138 = vsel %vm1106, %v1064, 0
        %v1141 = vsel %vm1106, %v1065, 0
        %v1144 = vsel %vm1106, %v1066, 0
        %v1147 = vsel %vm1106, %v1067, 0
        %v1150 = vsel %vm1106, %v1068, 0
        %v1153 = vsel %vm1106, %v1069, 0
        %1155 = vmatpush.bf16.msra.mxu0 0
        %1156 = vmatpush.bf16.msra.mxu0 0
        %1157 = vmatpush.bf16.msra.mxu0 0
        %1158 = vmatpush.bf16.msra.mxu0 0
        %1159 = vmatpush.bf16.msra.mxu0 %v1101
        %1160 = vmatpush.bf16.msra.mxu0 %v1100
        %1161 = vmatpush.bf16.msra.mxu0 %v1099
        %1162 = vmatpush.bf16.msra.mxu0 %v1098
        %1163 = vmatmul.bf16.gmra.mxu0 %v1108
        %v1164 = vpop.f32.mrf.mxu0
        %v1165 = vadd.f32 %v1080, %v1164
        %v1166 = vpop.f32.mrf.mxu0
        %v1167 = vadd.f32 %v1080, %v1166
        %1168 = vmatmul.bf16.gmra.mxu0 %v1111
        %v1169 = vpop.f32.mrf.mxu0
        %v1170 = vadd.f32 %v1080, %v1169
        %v1171 = vpop.f32.mrf.mxu0
        %v1172 = vadd.f32 %v1080, %v1171
        %1173 = vmatmul.bf16.gmra.mxu0 %v1114
        %v1174 = vpop.f32.mrf.mxu0
        %v1175 = vadd.f32 %v1080, %v1174
        %v1176 = vpop.f32.mrf.mxu0
        %v1177 = vadd.f32 %v1080, %v1176
        %1178 = vmatmul.bf16.gmra.mxu0 %v1117
        %v1179 = vpop.f32.mrf.mxu0
        %v1180 = vadd.f32 %v1080, %v1179
        %v1181 = vpop.f32.mrf.mxu0
        %v1182 = vadd.f32 %v1080, %v1181
        %1183 = vmatmul.bf16.gmra.mxu0 %v1120
        %v1184 = vpop.f32.mrf.mxu0
        %v1185 = vadd.f32 %v1080, %v1184
        %v1186 = vpop.f32.mrf.mxu0
        %v1187 = vadd.f32 %v1080, %v1186
        %1188 = vmatmul.bf16.gmra.mxu0 %v1123
        %v1189 = vpop.f32.mrf.mxu0
        %v1190 = vadd.f32 %v1080, %v1189
        %v1191 = vpop.f32.mrf.mxu0
        %v1192 = vadd.f32 %v1080, %v1191
        %1193 = vmatmul.bf16.gmra.mxu0 %v1126
        %v1194 = vpop.f32.mrf.mxu0
        %v1195 = vadd.f32 %v1080, %v1194
        %v1196 = vpop.f32.mrf.mxu0
        %v1197 = vadd.f32 %v1080, %v1196
        %1198 = vmatmul.bf16.gmra.mxu0 %v1129
        %v1199 = vpop.f32.mrf.mxu0
        %v1200 = vadd.f32 %v1080, %v1199
        %v1201 = vpop.f32.mrf.mxu0
        %v1202 = vadd.f32 %v1080, %v1201
        %1203 = vmatmul.bf16.gmra.mxu0 %v1132
        %v1204 = vpop.f32.mrf.mxu0
        %v1205 = vadd.f32 %v1080, %v1204
        %v1206 = vpop.f32.mrf.mxu0
        %v1207 = vadd.f32 %v1080, %v1206
        %1208 = vmatmul.bf16.gmra.mxu0 %v1135
        %v1209 = vpop.f32.mrf.mxu0
        %v1210 = vadd.f32 %v1080, %v1209
        %v1211 = vpop.f32.mrf.mxu0
        %v1212 = vadd.f32 %v1080, %v1211
        %1213 = vmatmul.bf16.gmra.mxu0 %v1138
        %v1214 = vpop.f32.mrf.mxu0
        %v1215 = vadd.f32 %v1080, %v1214
        %v1216 = vpop.f32.mrf.mxu0
        %v1217 = vadd.f32 %v1080, %v1216
        %1218 = vmatmul.bf16.gmra.mxu0 %v1141
        %v1219 = vpop.f32.mrf.mxu0
        %v1220 = vadd.f32 %v1080, %v1219
        %v1221 = vpop.f32.mrf.mxu0
        %v1222 = vadd.f32 %v1080, %v1221
        %1223 = vmatmul.bf16.gmra.mxu0 %v1144
        %v1224 = vpop.f32.mrf.mxu0
        %v1225 = vadd.f32 %v1080, %v1224
        %v1226 = vpop.f32.mrf.mxu0
        %v1227 = vadd.f32 %v1080, %v1226
        %1228 = vmatmul.bf16.gmra.mxu0 %v1147
        %v1229 = vpop.f32.mrf.mxu0
        %v1230 = vadd.f32 %v1080, %v1229
        %v1231 = vpop.f32.mrf.mxu0
        %v1232 = vadd.f32 %v1080, %v1231
        %1233 = vmatmul.bf16.gmra.mxu0 %v1150
        %v1234 = vpop.f32.mrf.mxu0
        %v1235 = vadd.f32 %v1080, %v1234
        %v1236 = vpop.f32.mrf.mxu0
        %v1237 = vadd.f32 %v1080, %v1236
        %1238 = vmatmul.bf16.gmra.mxu0 %v1153
        %v1239 = vpop.f32.mrf.mxu0
        %v1240 = vadd.f32 %v1080, %v1239
        %v1241 = vpop.f32.mrf.mxu0
        %v1242 = vadd.f32 %v1080, %v1241
        %1243 = vdwg.mxu0
        %v1244 = vmax.f32 %v1165, 0.0
        %v1245 = vmax.f32 %v1167, 0.0
        %v1246 = vmax.f32 %v1170, 0.0
        %v1247 = vmax.f32 %v1172, 0.0
        %v1248 = vmax.f32 %v1175, 0.0
        %v1249 = vmax.f32 %v1177, 0.0
        %v1250 = vmax.f32 %v1180, 0.0
        %v1251 = vmax.f32 %v1182, 0.0
        %v1252 = vmax.f32 %v1185, 0.0
        %v1253 = vmax.f32 %v1187, 0.0
        %v1254 = vmax.f32 %v1190, 0.0
        %v1255 = vmax.f32 %v1192, 0.0
        %v1256 = vmax.f32 %v1195, 0.0
        %v1257 = vmax.f32 %v1197, 0.0
        %v1258 = vmax.f32 %v1200, 0.0
        %v1259 = vmax.f32 %v1202, 0.0
        %v1260 = vmax.f32 %v1205, 0.0
        %v1261 = vmax.f32 %v1207, 0.0
        %v1262 = vmax.f32 %v1210, 0.0
        %v1263 = vmax.f32 %v1212, 0.0
        %v1264 = vmax.f32 %v1215, 0.0
        %v1265 = vmax.f32 %v1217, 0.0
        %v1266 = vmax.f32 %v1220, 0.0
        %v1267 = vmax.f32 %v1222, 0.0
        %v1268 = vmax.f32 %v1225, 0.0
        %v1269 = vmax.f32 %v1227, 0.0
        %v1270 = vmax.f32 %v1230, 0.0
        %v1271 = vmax.f32 %v1232, 0.0
        %v1272 = vmax.f32 %v1235, 0.0
        %v1273 = vmax.f32 %v1237, 0.0
        %v1274 = vmax.f32 %v1240, 0.0
        %v1275 = vmax.f32 %v1242, 0.0
        %1276 = vxpose.xlu0.b32.start [1/16] %v1244, 128
        %1277 = vxpose.xlu0.b32.cont [2/16] %v1245, 128
        %1278 = vxpose.xlu0.b32.cont [3/16] %v1246, 128
        %1279 = vxpose.xlu0.b32.cont [4/16] %v1247, 128
        %1280 = vxpose.xlu0.b32.cont [5/16] %v1248, 128
        %1281 = vxpose.xlu0.b32.cont [6/16] %v1249, 128
        %1282 = vxpose.xlu0.b32.cont [7/16] %v1250, 128
        %1283 = vxpose.xlu0.b32.cont [8/16] %v1251, 128
        %1284 = vxpose.xlu0.b32.cont [9/16] %v1252, 128
        %1285 = vxpose.xlu0.b32.cont [10/16] %v1253, 128
        %1286 = vxpose.xlu0.b32.cont [11/16] %v1254, 128
        %1287 = vxpose.xlu0.b32.cont [12/16] %v1255, 128
        %1288 = vxpose.xlu0.b32.cont [13/16] %v1256, 128
        %1289 = vxpose.xlu0.b32.cont [14/16] %v1257, 128
        %1290 = vxpose.xlu0.b32.cont [15/16] %v1258, 128
        %1291 = vxpose.xlu0.b32.end [16/16] %v1259, 128
        %v1292 = vpop.trf.xlu0
        %v1293 = vpop.trf.xlu0
        %v1294 = vpop.trf.xlu0
        %v1295 = vpop.trf.xlu0
        %v1296 = vpop.trf.xlu0
        %v1297 = vpop.trf.xlu0
        %v1298 = vpop.trf.xlu0
        %v1299 = vpop.trf.xlu0
        %v1300 = vpop.trf.xlu0
        %v1301 = vpop.trf.xlu0
        %v1302 = vpop.trf.xlu0
        %v1303 = vpop.trf.xlu0
        %v1304 = vpop.trf.xlu0
        %v1305 = vpop.trf.xlu0
        %v1306 = vpop.trf.xlu0
        %v1307 = vpop.trf.xlu0
        %1308 = vxpose.xlu0.b32.start [1/16] %v1260, 128
        %1309 = vxpose.xlu0.b32.cont [2/16] %v1261, 128
        %1310 = vxpose.xlu0.b32.cont [3/16] %v1262, 128
        %1311 = vxpose.xlu0.b32.cont [4/16] %v1263, 128
        %1312 = vxpose.xlu0.b32.cont [5/16] %v1264, 128
        %1313 = vxpose.xlu0.b32.cont [6/16] %v1265, 128
        %1314 = vxpose.xlu0.b32.cont [7/16] %v1266, 128
        %1315 = vxpose.xlu0.b32.cont [8/16] %v1267, 128
        %1316 = vxpose.xlu0.b32.cont [9/16] %v1268, 128
        %1317 = vxpose.xlu0.b32.cont [10/16] %v1269, 128
        %1318 = vxpose.xlu0.b32.cont [11/16] %v1270, 128
        %1319 = vxpose.xlu0.b32.cont [12/16] %v1271, 128
        %1320 = vxpose.xlu0.b32.cont [13/16] %v1272, 128
        %1321 = vxpose.xlu0.b32.cont [14/16] %v1273, 128
        %1322 = vxpose.xlu0.b32.cont [15/16] %v1274, 128
        %1323 = vxpose.xlu0.b32.end [16/16] %v1275, 128
        %v1324 = vpop.trf.xlu0
        %v1325 = vpop.trf.xlu0
        %v1326 = vpop.trf.xlu0
        %v1327 = vpop.trf.xlu0
        %v1328 = vpop.trf.xlu0
        %v1329 = vpop.trf.xlu0
        %v1330 = vpop.trf.xlu0
        %v1331 = vpop.trf.xlu0
        %v1332 = vpop.trf.xlu0
        %v1333 = vpop.trf.xlu0
        %v1334 = vpop.trf.xlu0
        %v1335 = vpop.trf.xlu0
        %v1336 = vpop.trf.xlu0
        %v1337 = vpop.trf.xlu0
        %v1338 = vpop.trf.xlu0
        %v1339 = vpop.trf.xlu0
        %1340 = vst [vmem:[%s356] sm:$0xff] %v1292
        %1341 = vst [vmem:[%s356 + $0x8] sm:$0xff] %v1324
        %1342 = vst [vmem:[%s356 + $0x10] sm:$0xff] %v1293
        %1343 = vst [vmem:[%s356 + $0x18] sm:$0xff] %v1325
        %1344 = vst [vmem:[%s356 + $0x20] sm:$0xff] %v1294
        %1345 = vst [vmem:[%s356 + $0x28] sm:$0xff] %v1326
        %1346 = vst [vmem:[%s356 + $0x30] sm:$0xff] %v1295
        %1347 = vst [vmem:[%s356 + $0x38] sm:$0xff] %v1327
        %1348 = vst [vmem:[%s356 + $0x40] sm:$0xff] %v1296
        %1349 = vst [vmem:[%s356 + $0x48] sm:$0xff] %v1328
        %1350 = vst [vmem:[%s356 + $0x50] sm:$0xff] %v1297
        %1351 = vst [vmem:[%s356 + $0x58] sm:$0xff] %v1329
        %1352 = vst [vmem:[%s356 + $0x60] sm:$0xff] %v1298
        %1353 = vst [vmem:[%s356 + $0x68] sm:$0xff] %v1330
        %1354 = vst [vmem:[%s356 + $0x70] sm:$0xff] %v1299
        %1355 = vst [vmem:[%s356 + $0x78] sm:$0xff] %v1331
        %1356 = vst [vmem:[%s356 + $0x80] sm:$0xff] %v1300
        %1357 = vst [vmem:[%s356 + $0x88] sm:$0xff] %v1332
        %1358 = vst [vmem:[%s356 + $0x90] sm:$0xff] %v1301
        %1359 = vst [vmem:[%s356 + $0x98] sm:$0xff] %v1333
        %1360 = vst [vmem:[%s356 + $0xa0] sm:$0xff] %v1302
        %1361 = vst [vmem:[%s356 + $0xa8] sm:$0xff] %v1334
        %1362 = vst [vmem:[%s356 + $0xb0] sm:$0xff] %v1303
        %1363 = vst [vmem:[%s356 + $0xb8] sm:$0xff] %v1335
        %1364 = vst [vmem:[%s356 + $0xc0] sm:$0xff] %v1304
        %1365 = vst [vmem:[%s356 + $0xc8] sm:$0xff] %v1336
        %1366 = vst [vmem:[%s356 + $0xd0] sm:$0xff] %v1305
        %1367 = vst [vmem:[%s356 + $0xd8] sm:$0xff] %v1337
        %1368 = vst [vmem:[%s356 + $0xe0] sm:$0xff] %v1306
        %1369 = vst [vmem:[%s356 + $0xe8] sm:$0xff] %v1338
        %1370 = vst [vmem:[%s356 + $0xf0] sm:$0xff] %v1307
        %1371 = vst [vmem:[%s356 + $0xf8] sm:$0xff] %v1339
        %v1372 = vpack.c.bf16 %v1245, %v1244
        %v1373 = vpack.c.bf16 %v1247, %v1246
        %v1374 = vpack.c.bf16 %v1249, %v1248
        %v1375 = vpack.c.bf16 %v1251, %v1250
        %v1376 = vpack.c.bf16 %v1253, %v1252
        %v1377 = vpack.c.bf16 %v1255, %v1254
        %v1378 = vpack.c.bf16 %v1257, %v1256
        %v1379 = vpack.c.bf16 %v1259, %v1258
        %v1380 = vpack.c.bf16 %v1261, %v1260
        %v1381 = vpack.c.bf16 %v1263, %v1262
        %v1382 = vpack.c.bf16 %v1265, %v1264
        %v1383 = vpack.c.bf16 %v1267, %v1266
        %v1384 = vpack.c.bf16 %v1269, %v1268
        %v1385 = vpack.c.bf16 %v1271, %v1270
        %v1386 = vpack.c.bf16 %v1273, %v1272
        %v1387 = vpack.c.bf16 %v1275, %v1274
        %v1388 = vld [vmem:[%s4] sm:$0xff]
        %v1389 = vld [vmem:[%s4 + $0x8] sm:$0xff]
        %v1390 = vld [vmem:[%s4 + $0x10] sm:$0xff]
        %v1391 = vld [vmem:[%s4 + $0x18] sm:$0xff]
        %v1392 = vld [vmem:[%s4 + $0x20] sm:$0xff]
        %v1393 = vld [vmem:[%s4 + $0x28] sm:$0xff]
        %v1394 = vld [vmem:[%s4 + $0x30] sm:$0xff]
        %v1395 = vld [vmem:[%s4 + $0x38] sm:$0xff]
        %v1396 = vld [vmem:[%s4 + $0x40] sm:$0xff]
        %v1397 = vld [vmem:[%s4 + $0x48] sm:$0xff]
        %v1398 = vld [vmem:[%s4 + $0x50] sm:$0xff]
        %v1399 = vld [vmem:[%s4 + $0x58] sm:$0xff]
        %v1400 = vld [vmem:[%s4 + $0x60] sm:$0xff]
        %v1401 = vld [vmem:[%s4 + $0x68] sm:$0xff]
        %v1402 = vld [vmem:[%s4 + $0x70] sm:$0xff]
        %v1403 = vld [vmem:[%s4 + $0x78] sm:$0xff]
        %v1404 = vld [vmem:[%s5] sm:$0x3]
        %v1406 = vperm.slane %v1404, 0
        %v1407 = vperm.slane %v1404, 1
        %v1426 = vunpack.c.l.b16 %v1388
        %v1427 = vunpack.c.h.b16 %v1388
        %v1428 = vunpack.c.l.b16 %v1389
        %v1429 = vunpack.c.h.b16 %v1389
        %v1430 = vunpack.c.l.b16 %v1390
        %v1431 = vunpack.c.h.b16 %v1390
        %v1432 = vunpack.c.l.b16 %v1391
        %v1433 = vunpack.c.h.b16 %v1391
        %v1434 = vunpack.c.l.b16 %v1392
        %v1435 = vunpack.c.h.b16 %v1392
        %v1436 = vunpack.c.l.b16 %v1393
        %v1437 = vunpack.c.h.b16 %v1393
        %v1438 = vunpack.c.l.b16 %v1394
        %v1439 = vunpack.c.h.b16 %v1394
        %v1440 = vunpack.c.l.b16 %v1395
        %v1441 = vunpack.c.h.b16 %v1395
        %v1442 = vunpack.c.l.b16 %v1396
        %v1443 = vunpack.c.h.b16 %v1396
        %v1444 = vunpack.c.l.b16 %v1397
        %v1445 = vunpack.c.h.b16 %v1397
        %v1446 = vunpack.c.l.b16 %v1398
        %v1447 = vunpack.c.h.b16 %v1398
        %v1448 = vunpack.c.l.b16 %v1399
        %v1449 = vunpack.c.h.b16 %v1399
        %v1450 = vunpack.c.l.b16 %v1400
        %v1451 = vunpack.c.h.b16 %v1400
        %v1452 = vunpack.c.l.b16 %v1401
        %v1453 = vunpack.c.h.b16 %v1401
        %v1454 = vunpack.c.l.b16 %v1402
        %v1455 = vunpack.c.h.b16 %v1402
        %v1456 = vunpack.c.l.b16 %v1403
        %v1457 = vunpack.c.h.b16 %v1403
        %v1458 = vpack.c.b16 %v1428, %v1426
        %v1459 = vpack.c.b16 %v1429, %v1427
        %v1460 = vpack.c.b16 %v1432, %v1430
        %v1461 = vpack.c.b16 %v1433, %v1431
        %v1462 = vpack.c.b16 %v1436, %v1434
        %v1463 = vpack.c.b16 %v1437, %v1435
        %v1464 = vpack.c.b16 %v1440, %v1438
        %v1465 = vpack.c.b16 %v1441, %v1439
        %v1466 = vpack.c.b16 %v1444, %v1442
        %v1467 = vpack.c.b16 %v1445, %v1443
        %v1468 = vpack.c.b16 %v1448, %v1446
        %v1469 = vpack.c.b16 %v1449, %v1447
        %v1470 = vpack.c.b16 %v1452, %v1450
        %v1471 = vpack.c.b16 %v1453, %v1451
        %v1472 = vpack.c.b16 %v1456, %v1454
        %v1473 = vpack.c.b16 %v1457, %v1455
        %1490 = vmatpush.bf16.msra.mxu0 %v1472
        %1491 = vmatpush.bf16.msra.mxu0 %v1470
        %1492 = vmatpush.bf16.msra.mxu0 %v1468
        %1493 = vmatpush.bf16.msra.mxu0 %v1466
        %1494 = vmatpush.bf16.msra.mxu0 %v1464
        %1495 = vmatpush.bf16.msra.mxu0 %v1462
        %1496 = vmatpush.bf16.msra.mxu0 %v1460
        %1497 = vmatpush.bf16.msra.mxu0 %v1458
        %1498 = vmatmul.bf16.gmra.mxu0 %v1372
        %v1499 = vpop.f32.mrf.mxu0
        %v1500 = vadd.f32 %v1406, %v1499
        %v1501 = vpop.f32.mrf.mxu0
        %v1502 = vadd.f32 %v1406, %v1501
        %1503 = vmatmul.bf16.gmra.mxu0 %v1373
        %v1504 = vpop.f32.mrf.mxu0
        %v1505 = vadd.f32 %v1406, %v1504
        %v1506 = vpop.f32.mrf.mxu0
        %v1507 = vadd.f32 %v1406, %v1506
        %1508 = vmatmul.bf16.gmra.mxu0 %v1374
        %v1509 = vpop.f32.mrf.mxu0
        %v1510 = vadd.f32 %v1406, %v1509
        %v1511 = vpop.f32.mrf.mxu0
        %v1512 = vadd.f32 %v1406, %v1511
        %1513 = vmatmul.bf16.gmra.mxu0 %v1375
        %v1514 = vpop.f32.mrf.mxu0
        %v1515 = vadd.f32 %v1406, %v1514
        %v1516 = vpop.f32.mrf.mxu0
        %v1517 = vadd.f32 %v1406, %v1516
        %1518 = vmatmul.bf16.gmra.mxu0 %v1376
        %v1519 = vpop.f32.mrf.mxu0
        %v1520 = vadd.f32 %v1406, %v1519
        %v1521 = vpop.f32.mrf.mxu0
        %v1522 = vadd.f32 %v1406, %v1521
        %1523 = vmatmul.bf16.gmra.mxu0 %v1377
        %v1524 = vpop.f32.mrf.mxu0
        %v1525 = vadd.f32 %v1406, %v1524
        %v1526 = vpop.f32.mrf.mxu0
        %v1527 = vadd.f32 %v1406, %v1526
        %1528 = vmatmul.bf16.gmra.mxu0 %v1378
        %v1529 = vpop.f32.mrf.mxu0
        %v1530 = vadd.f32 %v1406, %v1529
        %v1531 = vpop.f32.mrf.mxu0
        %v1532 = vadd.f32 %v1406, %v1531
        %1533 = vmatmul.bf16.gmra.mxu0 %v1379
        %v1534 = vpop.f32.mrf.mxu0
        %v1535 = vadd.f32 %v1406, %v1534
        %v1536 = vpop.f32.mrf.mxu0
        %v1537 = vadd.f32 %v1406, %v1536
        %1538 = vmatmul.bf16.gmra.mxu0 %v1380
        %v1539 = vpop.f32.mrf.mxu0
        %v1540 = vadd.f32 %v1406, %v1539
        %v1541 = vpop.f32.mrf.mxu0
        %v1542 = vadd.f32 %v1406, %v1541
        %1543 = vmatmul.bf16.gmra.mxu0 %v1381
        %v1544 = vpop.f32.mrf.mxu0
        %v1545 = vadd.f32 %v1406, %v1544
        %v1546 = vpop.f32.mrf.mxu0
        %v1547 = vadd.f32 %v1406, %v1546
        %1548 = vmatmul.bf16.gmra.mxu0 %v1382
        %v1549 = vpop.f32.mrf.mxu0
        %v1550 = vadd.f32 %v1406, %v1549
        %v1551 = vpop.f32.mrf.mxu0
        %v1552 = vadd.f32 %v1406, %v1551
        %1553 = vmatmul.bf16.gmra.mxu0 %v1383
        %v1554 = vpop.f32.mrf.mxu0
        %v1555 = vadd.f32 %v1406, %v1554
        %v1556 = vpop.f32.mrf.mxu0
        %v1557 = vadd.f32 %v1406, %v1556
        %1558 = vmatmul.bf16.gmra.mxu0 %v1384
        %v1559 = vpop.f32.mrf.mxu0
        %v1560 = vadd.f32 %v1406, %v1559
        %v1561 = vpop.f32.mrf.mxu0
        %v1562 = vadd.f32 %v1406, %v1561
        %1563 = vmatmul.bf16.gmra.mxu0 %v1385
        %v1564 = vpop.f32.mrf.mxu0
        %v1565 = vadd.f32 %v1406, %v1564
        %v1566 = vpop.f32.mrf.mxu0
        %v1567 = vadd.f32 %v1406, %v1566
        %1568 = vmatmul.bf16.gmra.mxu0 %v1386
        %v1569 = vpop.f32.mrf.mxu0
        %v1570 = vadd.f32 %v1406, %v1569
        %v1571 = vpop.f32.mrf.mxu0
        %v1572 = vadd.f32 %v1406, %v1571
        %1573 = vmatmul.bf16.gmra.mxu0 %v1387
        %v1574 = vpop.f32.mrf.mxu0
        %v1575 = vadd.f32 %v1406, %v1574
        %v1576 = vpop.f32.mrf.mxu0
        %v1577 = vadd.f32 %v1406, %v1576
        %1578 = vdwg.mxu0
        %1579 = vmatpush.bf16.msra.mxu0 %v1473
        %1580 = vmatpush.bf16.msra.mxu0 %v1471
        %1581 = vmatpush.bf16.msra.mxu0 %v1469
        %1582 = vmatpush.bf16.msra.mxu0 %v1467
        %1583 = vmatpush.bf16.msra.mxu0 %v1465
        %1584 = vmatpush.bf16.msra.mxu0 %v1463
        %1585 = vmatpush.bf16.msra.mxu0 %v1461
        %1586 = vmatpush.bf16.msra.mxu0 %v1459
        %1587 = vmatmul.bf16.gmra.mxu0 %v1372
        %v1588 = vpop.f32.mrf.mxu0
        %v1589 = vadd.f32 %v1407, %v1588
        %v1590 = vpop.f32.mrf.mxu0
        %v1591 = vadd.f32 %v1407, %v1590
        %1592 = vmatmul.bf16.gmra.mxu0 %v1373
        %v1593 = vpop.f32.mrf.mxu0
        %v1594 = vadd.f32 %v1407, %v1593
        %v1595 = vpop.f32.mrf.mxu0
        %v1596 = vadd.f32 %v1407, %v1595
        %1597 = vmatmul.bf16.gmra.mxu0 %v1374
        %v1598 = vpop.f32.mrf.mxu0
        %v1599 = vadd.f32 %v1407, %v1598
        %v1600 = vpop.f32.mrf.mxu0
        %v1601 = vadd.f32 %v1407, %v1600
        %1602 = vmatmul.bf16.gmra.mxu0 %v1375
        %v1603 = vpop.f32.mrf.mxu0
        %v1604 = vadd.f32 %v1407, %v1603
        %v1605 = vpop.f32.mrf.mxu0
        %v1606 = vadd.f32 %v1407, %v1605
        %1607 = vmatmul.bf16.gmra.mxu0 %v1376
        %v1608 = vpop.f32.mrf.mxu0
        %v1609 = vadd.f32 %v1407, %v1608
        %v1610 = vpop.f32.mrf.mxu0
        %v1611 = vadd.f32 %v1407, %v1610
        %1612 = vmatmul.bf16.gmra.mxu0 %v1377
        %v1613 = vpop.f32.mrf.mxu0
        %v1614 = vadd.f32 %v1407, %v1613
        %v1615 = vpop.f32.mrf.mxu0
        %v1616 = vadd.f32 %v1407, %v1615
        %1617 = vmatmul.bf16.gmra.mxu0 %v1378
        %v1618 = vpop.f32.mrf.mxu0
        %v1619 = vadd.f32 %v1407, %v1618
        %v1620 = vpop.f32.mrf.mxu0
        %v1621 = vadd.f32 %v1407, %v1620
        %1622 = vmatmul.bf16.gmra.mxu0 %v1379
        %v1623 = vpop.f32.mrf.mxu0
        %v1624 = vadd.f32 %v1407, %v1623
        %v1625 = vpop.f32.mrf.mxu0
        %v1626 = vadd.f32 %v1407, %v1625
        %1627 = vmatmul.bf16.gmra.mxu0 %v1380
        %v1628 = vpop.f32.mrf.mxu0
        %v1629 = vadd.f32 %v1407, %v1628
        %v1630 = vpop.f32.mrf.mxu0
        %v1631 = vadd.f32 %v1407, %v1630
        %1632 = vmatmul.bf16.gmra.mxu0 %v1381
        %v1633 = vpop.f32.mrf.mxu0
        %v1634 = vadd.f32 %v1407, %v1633
        %v1635 = vpop.f32.mrf.mxu0
        %v1636 = vadd.f32 %v1407, %v1635
        %1637 = vmatmul.bf16.gmra.mxu0 %v1382
        %v1638 = vpop.f32.mrf.mxu0
        %v1639 = vadd.f32 %v1407, %v1638
        %v1640 = vpop.f32.mrf.mxu0
        %v1641 = vadd.f32 %v1407, %v1640
        %1642 = vmatmul.bf16.gmra.mxu0 %v1383
        %v1643 = vpop.f32.mrf.mxu0
        %v1644 = vadd.f32 %v1407, %v1643
        %v1645 = vpop.f32.mrf.mxu0
        %v1646 = vadd.f32 %v1407, %v1645
        %1647 = vmatmul.bf16.gmra.mxu0 %v1384
        %v1648 = vpop.f32.mrf.mxu0
        %v1649 = vadd.f32 %v1407, %v1648
        %v1650 = vpop.f32.mrf.mxu0
        %v1651 = vadd.f32 %v1407, %v1650
        %1652 = vmatmul.bf16.gmra.mxu0 %v1385
        %v1653 = vpop.f32.mrf.mxu0
        %v1654 = vadd.f32 %v1407, %v1653
        %v1655 = vpop.f32.mrf.mxu0
        %v1656 = vadd.f32 %v1407, %v1655
        %1657 = vmatmul.bf16.gmra.mxu0 %v1386
        %v1658 = vpop.f32.mrf.mxu0
        %v1659 = vadd.f32 %v1407, %v1658
        %v1660 = vpop.f32.mrf.mxu0
        %v1661 = vadd.f32 %v1407, %v1660
        %1662 = vmatmul.bf16.gmra.mxu0 %v1387
        %v1663 = vpop.f32.mrf.mxu0
        %v1664 = vadd.f32 %v1407, %v1663
        %v1665 = vpop.f32.mrf.mxu0
        %v1666 = vadd.f32 %v1407, %v1665
        %1667 = vdwg.mxu0
        %v1668 = vmax.f32 %v1500, 0.0
        %v1669 = vmax.f32 %v1589, 0.0
        %v1670 = vmax.f32 %v1502, 0.0
        %v1671 = vmax.f32 %v1591, 0.0
        %v1672 = vmax.f32 %v1505, 0.0
        %v1673 = vmax.f32 %v1594, 0.0
        %v1674 = vmax.f32 %v1507, 0.0
        %v1675 = vmax.f32 %v1596, 0.0
        %v1676 = vmax.f32 %v1510, 0.0
        %v1677 = vmax.f32 %v1599, 0.0
        %v1678 = vmax.f32 %v1512, 0.0
        %v1679 = vmax.f32 %v1601, 0.0
        %v1680 = vmax.f32 %v1515, 0.0
        %v1681 = vmax.f32 %v1604, 0.0
        %v1682 = vmax.f32 %v1517, 0.0
        %v1683 = vmax.f32 %v1606, 0.0
        %v1684 = vmax.f32 %v1520, 0.0
        %v1685 = vmax.f32 %v1609, 0.0
        %v1686 = vmax.f32 %v1522, 0.0
        %v1687 = vmax.f32 %v1611, 0.0
        %v1688 = vmax.f32 %v1525, 0.0
        %v1689 = vmax.f32 %v1614, 0.0
        %v1690 = vmax.f32 %v1527, 0.0
        %v1691 = vmax.f32 %v1616, 0.0
        %v1692 = vmax.f32 %v1530, 0.0
        %v1693 = vmax.f32 %v1619, 0.0
        %v1694 = vmax.f32 %v1532, 0.0
        %v1695 = vmax.f32 %v1621, 0.0
        %v1696 = vmax.f32 %v1535, 0.0
        %v1697 = vmax.f32 %v1624, 0.0
        %v1698 = vmax.f32 %v1537, 0.0
        %v1699 = vmax.f32 %v1626, 0.0
        %v1700 = vmax.f32 %v1540, 0.0
        %v1701 = vmax.f32 %v1629, 0.0
        %v1702 = vmax.f32 %v1542, 0.0
        %v1703 = vmax.f32 %v1631, 0.0
        %v1704 = vmax.f32 %v1545, 0.0
        %v1705 = vmax.f32 %v1634, 0.0
        %v1706 = vmax.f32 %v1547, 0.0
        %v1707 = vmax.f32 %v1636, 0.0
        %v1708 = vmax.f32 %v1550, 0.0
        %v1709 = vmax.f32 %v1639, 0.0
        %v1710 = vmax.f32 %v1552, 0.0
        %v1711 = vmax.f32 %v1641, 0.0
        %v1712 = vmax.f32 %v1555, 0.0
        %v1713 = vmax.f32 %v1644, 0.0
        %v1714 = vmax.f32 %v1557, 0.0
        %v1715 = vmax.f32 %v1646, 0.0
        %v1716 = vmax.f32 %v1560, 0.0
        %v1717 = vmax.f32 %v1649, 0.0
        %v1718 = vmax.f32 %v1562, 0.0
        %v1719 = vmax.f32 %v1651, 0.0
        %v1720 = vmax.f32 %v1565, 0.0
        %v1721 = vmax.f32 %v1654, 0.0
        %v1722 = vmax.f32 %v1567, 0.0
        %v1723 = vmax.f32 %v1656, 0.0
        %v1724 = vmax.f32 %v1570, 0.0
        %v1725 = vmax.f32 %v1659, 0.0
        %v1726 = vmax.f32 %v1572, 0.0
        %v1727 = vmax.f32 %v1661, 0.0
        %v1728 = vmax.f32 %v1575, 0.0
        %v1729 = vmax.f32 %v1664, 0.0
        %v1730 = vmax.f32 %v1577, 0.0
        %v1731 = vmax.f32 %v1666, 0.0
        %v1732 = vpack.c.bf16 %v1670, %v1668
        %v1733 = vpack.c.bf16 %v1671, %v1669
        %v1734 = vpack.c.bf16 %v1674, %v1672
        %v1735 = vpack.c.bf16 %v1675, %v1673
        %v1736 = vpack.c.bf16 %v1678, %v1676
        %v1737 = vpack.c.bf16 %v1679, %v1677
        %v1738 = vpack.c.bf16 %v1682, %v1680
        %v1739 = vpack.c.bf16 %v1683, %v1681
        %v1740 = vpack.c.bf16 %v1686, %v1684
        %v1741 = vpack.c.bf16 %v1687, %v1685
        %v1742 = vpack.c.bf16 %v1690, %v1688
        %v1743 = vpack.c.bf16 %v1691, %v1689
        %v1744 = vpack.c.bf16 %v1694, %v1692
        %v1745 = vpack.c.bf16 %v1695, %v1693
        %v1746 = vpack.c.bf16 %v1698, %v1696
        %v1747 = vpack.c.bf16 %v1699, %v1697
        %v1748 = vpack.c.bf16 %v1702, %v1700
        %v1749 = vpack.c.bf16 %v1703, %v1701
        %v1750 = vpack.c.bf16 %v1706, %v1704
        %v1751 = vpack.c.bf16 %v1707, %v1705
        %v1752 = vpack.c.bf16 %v1710, %v1708
        %v1753 = vpack.c.bf16 %v1711, %v1709
        %v1754 = vpack.c.bf16 %v1714, %v1712
        %v1755 = vpack.c.bf16 %v1715, %v1713
        %v1756 = vpack.c.bf16 %v1718, %v1716
        %v1757 = vpack.c.bf16 %v1719, %v1717
        %v1758 = vpack.c.bf16 %v1722, %v1720
        %v1759 = vpack.c.bf16 %v1723, %v1721
        %v1760 = vpack.c.bf16 %v1726, %v1724
        %v1761 = vpack.c.bf16 %v1727, %v1725
        %v1762 = vpack.c.bf16 %v1730, %v1728
        %v1763 = vpack.c.bf16 %v1731, %v1729
        %v1764 = vld [vmem:[%s6] sm:$0xf]
        %v1765 = vld [vmem:[%s6 + $0x4] sm:$0xf]
        %v1766 = vld [vmem:[%s6 + $0x8] sm:$0xf]
        %v1767 = vld [vmem:[%s6 + $0xc] sm:$0xf]
        %v1768 = vld [vmem:[%s6 + $0x10] sm:$0xf]
        %v1769 = vld [vmem:[%s6 + $0x14] sm:$0xf]
        %v1770 = vld [vmem:[%s6 + $0x18] sm:$0xf]
        %v1771 = vld [vmem:[%s6 + $0x1c] sm:$0xf]
        %v1772 = vld [vmem:[%s6 + $0x20] sm:$0xf]
        %v1773 = vld [vmem:[%s6 + $0x24] sm:$0xf]
        %v1774 = vld [vmem:[%s6 + $0x28] sm:$0xf]
        %v1775 = vld [vmem:[%s6 + $0x2c] sm:$0xf]
        %v1776 = vld [vmem:[%s6 + $0x30] sm:$0xf]
        %v1777 = vld [vmem:[%s6 + $0x34] sm:$0xf]
        %v1778 = vld [vmem:[%s6 + $0x38] sm:$0xf]
        %v1779 = vld [vmem:[%s6 + $0x3c] sm:$0xf]
        %v1780 = vld [vmem:[%s6 + $0x40] sm:$0xf]
        %v1781 = vld [vmem:[%s6 + $0x44] sm:$0xf]
        %v1782 = vld [vmem:[%s6 + $0x48] sm:$0xf]
        %v1783 = vld [vmem:[%s6 + $0x4c] sm:$0xf]
        %v1784 = vld [vmem:[%s6 + $0x50] sm:$0xf]
        %v1785 = vld [vmem:[%s6 + $0x54] sm:$0xf]
        %v1786 = vld [vmem:[%s6 + $0x58] sm:$0xf]
        %v1787 = vld [vmem:[%s6 + $0x5c] sm:$0xf]
        %v1788 = vld [vmem:[%s6 + $0x60] sm:$0xf]
        %v1789 = vld [vmem:[%s6 + $0x64] sm:$0xf]
        %v1790 = vld [vmem:[%s6 + $0x68] sm:$0xf]
        %v1791 = vld [vmem:[%s6 + $0x6c] sm:$0xf]
        %v1792 = vld [vmem:[%s6 + $0x70] sm:$0xf]
        %v1793 = vld [vmem:[%s6 + $0x74] sm:$0xf]
        %v1794 = vld [vmem:[%s6 + $0x78] sm:$0xf]
        %v1795 = vld [vmem:[%s6 + $0x7c] sm:$0xf]
        %v1796 = vld [vmem:[%s7] sm:$0x1]
        %v1798 = vperm.slane %v1796, 0
        %v1832 = vunpack.c.l.b16 %v1764
        %v1833 = vunpack.c.l.b16 %v1765
        %v1834 = vunpack.c.l.b16 %v1766
        %v1835 = vunpack.c.l.b16 %v1767
        %v1836 = vunpack.c.l.b16 %v1768
        %v1837 = vunpack.c.l.b16 %v1769
        %v1838 = vunpack.c.l.b16 %v1770
        %v1839 = vunpack.c.l.b16 %v1771
        %v1840 = vunpack.c.l.b16 %v1772
        %v1841 = vunpack.c.l.b16 %v1773
        %v1842 = vunpack.c.l.b16 %v1774
        %v1843 = vunpack.c.l.b16 %v1775
        %v1844 = vunpack.c.l.b16 %v1776
        %v1845 = vunpack.c.l.b16 %v1777
        %v1846 = vunpack.c.l.b16 %v1778
        %v1847 = vunpack.c.l.b16 %v1779
        %v1848 = vunpack.c.l.b16 %v1780
        %v1849 = vunpack.c.l.b16 %v1781
        %v1850 = vunpack.c.l.b16 %v1782
        %v1851 = vunpack.c.l.b16 %v1783
        %v1852 = vunpack.c.l.b16 %v1784
        %v1853 = vunpack.c.l.b16 %v1785
        %v1854 = vunpack.c.l.b16 %v1786
        %v1855 = vunpack.c.l.b16 %v1787
        %v1856 = vunpack.c.l.b16 %v1788
        %v1857 = vunpack.c.l.b16 %v1789
        %v1858 = vunpack.c.l.b16 %v1790
        %v1859 = vunpack.c.l.b16 %v1791
        %v1860 = vunpack.c.l.b16 %v1792
        %v1861 = vunpack.c.l.b16 %v1793
        %v1862 = vunpack.c.l.b16 %v1794
        %v1863 = vunpack.c.l.b16 %v1795
        %v1864 = vpack.c.b16 %v1833, %v1832
        %v1865 = vpack.c.b16 %v1835, %v1834
        %v1866 = vpack.c.b16 %v1837, %v1836
        %v1867 = vpack.c.b16 %v1839, %v1838
        %v1868 = vpack.c.b16 %v1841, %v1840
        %v1869 = vpack.c.b16 %v1843, %v1842
        %v1870 = vpack.c.b16 %v1845, %v1844
        %v1871 = vpack.c.b16 %v1847, %v1846
        %v1872 = vpack.c.b16 %v1849, %v1848
        %v1873 = vpack.c.b16 %v1851, %v1850
        %v1874 = vpack.c.b16 %v1853, %v1852
        %v1875 = vpack.c.b16 %v1855, %v1854
        %v1876 = vpack.c.b16 %v1857, %v1856
        %v1877 = vpack.c.b16 %v1859, %v1858
        %v1878 = vpack.c.b16 %v1861, %v1860
        %v1879 = vpack.c.b16 %v1863, %v1862
        %1896 = vmatpush.bf16.msra.mxu0 %v1871
        %1897 = vmatpush.bf16.msra.mxu0 %v1870
        %1898 = vmatpush.bf16.msra.mxu0 %v1869
        %1899 = vmatpush.bf16.msra.mxu0 %v1868
        %1900 = vmatpush.bf16.msra.mxu0 %v1867
        %1901 = vmatpush.bf16.msra.mxu0 %v1866
        %1902 = vmatpush.bf16.msra.mxu0 %v1865
        %1903 = vmatpush.bf16.msra.mxu0 %v1864
        %1904 = vmatmul.bf16.gmra.mxu0 %v1732
        %v1905 = vpop.f32.mrf.mxu0
        %v1906 = vadd.f32 %v1798, %v1905
        %v1907 = vpop.f32.mrf.mxu0
        %v1908 = vadd.f32 %v1798, %v1907
        %1909 = vmatmul.bf16.gmra.mxu0 %v1734
        %v1910 = vpop.f32.mrf.mxu0
        %v1911 = vadd.f32 %v1798, %v1910
        %v1912 = vpop.f32.mrf.mxu0
        %v1913 = vadd.f32 %v1798, %v1912
        %1914 = vmatmul.bf16.gmra.mxu0 %v1736
        %v1915 = vpop.f32.mrf.mxu0
        %v1916 = vadd.f32 %v1798, %v1915
        %v1917 = vpop.f32.mrf.mxu0
        %v1918 = vadd.f32 %v1798, %v1917
        %1919 = vmatmul.bf16.gmra.mxu0 %v1738
        %v1920 = vpop.f32.mrf.mxu0
        %v1921 = vadd.f32 %v1798, %v1920
        %v1922 = vpop.f32.mrf.mxu0
        %v1923 = vadd.f32 %v1798, %v1922
        %1924 = vmatmul.bf16.gmra.mxu0 %v1740
        %v1925 = vpop.f32.mrf.mxu0
        %v1926 = vadd.f32 %v1798, %v1925
        %v1927 = vpop.f32.mrf.mxu0
        %v1928 = vadd.f32 %v1798, %v1927
        %1929 = vmatmul.bf16.gmra.mxu0 %v1742
        %v1930 = vpop.f32.mrf.mxu0
        %v1931 = vadd.f32 %v1798, %v1930
        %v1932 = vpop.f32.mrf.mxu0
        %v1933 = vadd.f32 %v1798, %v1932
        %1934 = vmatmul.bf16.gmra.mxu0 %v1744
        %v1935 = vpop.f32.mrf.mxu0
        %v1936 = vadd.f32 %v1798, %v1935
        %v1937 = vpop.f32.mrf.mxu0
        %v1938 = vadd.f32 %v1798, %v1937
        %1939 = vmatmul.bf16.gmra.mxu0 %v1746
        %v1940 = vpop.f32.mrf.mxu0
        %v1941 = vadd.f32 %v1798, %v1940
        %v1942 = vpop.f32.mrf.mxu0
        %v1943 = vadd.f32 %v1798, %v1942
        %1944 = vmatmul.bf16.gmra.mxu0 %v1748
        %v1945 = vpop.f32.mrf.mxu0
        %v1946 = vadd.f32 %v1798, %v1945
        %v1947 = vpop.f32.mrf.mxu0
        %v1948 = vadd.f32 %v1798, %v1947
        %1949 = vmatmul.bf16.gmra.mxu0 %v1750
        %v1950 = vpop.f32.mrf.mxu0
        %v1951 = vadd.f32 %v1798, %v1950
        %v1952 = vpop.f32.mrf.mxu0
        %v1953 = vadd.f32 %v1798, %v1952
        %1954 = vmatmul.bf16.gmra.mxu0 %v1752
        %v1955 = vpop.f32.mrf.mxu0
        %v1956 = vadd.f32 %v1798, %v1955
        %v1957 = vpop.f32.mrf.mxu0
        %v1958 = vadd.f32 %v1798, %v1957
        %1959 = vmatmul.bf16.gmra.mxu0 %v1754
        %v1960 = vpop.f32.mrf.mxu0
        %v1961 = vadd.f32 %v1798, %v1960
        %v1962 = vpop.f32.mrf.mxu0
        %v1963 = vadd.f32 %v1798, %v1962
        %1964 = vmatmul.bf16.gmra.mxu0 %v1756
        %v1965 = vpop.f32.mrf.mxu0
        %v1966 = vadd.f32 %v1798, %v1965
        %v1967 = vpop.f32.mrf.mxu0
        %v1968 = vadd.f32 %v1798, %v1967
        %1969 = vmatmul.bf16.gmra.mxu0 %v1758
        %v1970 = vpop.f32.mrf.mxu0
        %v1971 = vadd.f32 %v1798, %v1970
        %v1972 = vpop.f32.mrf.mxu0
        %v1973 = vadd.f32 %v1798, %v1972
        %1974 = vmatmul.bf16.gmra.mxu0 %v1760
        %v1975 = vpop.f32.mrf.mxu0
        %v1976 = vadd.f32 %v1798, %v1975
        %v1977 = vpop.f32.mrf.mxu0
        %v1978 = vadd.f32 %v1798, %v1977
        %1979 = vmatmul.bf16.gmra.mxu0 %v1762
        %v1980 = vpop.f32.mrf.mxu0
        %v1981 = vadd.f32 %v1798, %v1980
        %v1982 = vpop.f32.mrf.mxu0
        %v1983 = vadd.f32 %v1798, %v1982
        %1984 = vdwg.mxu0
        %1985 = vmatpush.bf16.msra.mxu0 %v1879
        %1986 = vmatpush.bf16.msra.mxu0 %v1878
        %1987 = vmatpush.bf16.msra.mxu0 %v1877
        %1988 = vmatpush.bf16.msra.mxu0 %v1876
        %1989 = vmatpush.bf16.msra.mxu0 %v1875
        %1990 = vmatpush.bf16.msra.mxu0 %v1874
        %1991 = vmatpush.bf16.msra.mxu0 %v1873
        %1992 = vmatpush.bf16.msra.mxu0 %v1872
        %1993 = vmatmul.bf16.gmra.mxu0 %v1733
        %v1994 = vpop.f32.mrf.mxu0
        %v1995 = vadd.f32 %v1906, %v1994
        %v1996 = vpop.f32.mrf.mxu0
        %v1997 = vadd.f32 %v1908, %v1996
        %1998 = vmatmul.bf16.gmra.mxu0 %v1735
        %v1999 = vpop.f32.mrf.mxu0
        %v2000 = vadd.f32 %v1911, %v1999
        %v2001 = vpop.f32.mrf.mxu0
        %v2002 = vadd.f32 %v1913, %v2001
        %2003 = vmatmul.bf16.gmra.mxu0 %v1737
        %v2004 = vpop.f32.mrf.mxu0
        %v2005 = vadd.f32 %v1916, %v2004
        %v2006 = vpop.f32.mrf.mxu0
        %v2007 = vadd.f32 %v1918, %v2006
        %2008 = vmatmul.bf16.gmra.mxu0 %v1739
        %v2009 = vpop.f32.mrf.mxu0
        %v2010 = vadd.f32 %v1921, %v2009
        %v2011 = vpop.f32.mrf.mxu0
        %v2012 = vadd.f32 %v1923, %v2011
        %2013 = vmatmul.bf16.gmra.mxu0 %v1741
        %v2014 = vpop.f32.mrf.mxu0
        %v2015 = vadd.f32 %v1926, %v2014
        %v2016 = vpop.f32.mrf.mxu0
        %v2017 = vadd.f32 %v1928, %v2016
        %2018 = vmatmul.bf16.gmra.mxu0 %v1743
        %v2019 = vpop.f32.mrf.mxu0
        %v2020 = vadd.f32 %v1931, %v2019
        %v2021 = vpop.f32.mrf.mxu0
        %v2022 = vadd.f32 %v1933, %v2021
        %2023 = vmatmul.bf16.gmra.mxu0 %v1745
        %v2024 = vpop.f32.mrf.mxu0
        %v2025 = vadd.f32 %v1936, %v2024
        %v2026 = vpop.f32.mrf.mxu0
        %v2027 = vadd.f32 %v1938, %v2026
        %2028 = vmatmul.bf16.gmra.mxu0 %v1747
        %v2029 = vpop.f32.mrf.mxu0
        %v2030 = vadd.f32 %v1941, %v2029
        %v2031 = vpop.f32.mrf.mxu0
        %v2032 = vadd.f32 %v1943, %v2031
        %2033 = vmatmul.bf16.gmra.mxu0 %v1749
        %v2034 = vpop.f32.mrf.mxu0
        %v2035 = vadd.f32 %v1946, %v2034
        %v2036 = vpop.f32.mrf.mxu0
        %v2037 = vadd.f32 %v1948, %v2036
        %2038 = vmatmul.bf16.gmra.mxu0 %v1751
        %v2039 = vpop.f32.mrf.mxu0
        %v2040 = vadd.f32 %v1951, %v2039
        %v2041 = vpop.f32.mrf.mxu0
        %v2042 = vadd.f32 %v1953, %v2041
        %2043 = vmatmul.bf16.gmra.mxu0 %v1753
        %v2044 = vpop.f32.mrf.mxu0
        %v2045 = vadd.f32 %v1956, %v2044
        %v2046 = vpop.f32.mrf.mxu0
        %v2047 = vadd.f32 %v1958, %v2046
        %2048 = vmatmul.bf16.gmra.mxu0 %v1755
        %v2049 = vpop.f32.mrf.mxu0
        %v2050 = vadd.f32 %v1961, %v2049
        %v2051 = vpop.f32.mrf.mxu0
        %v2052 = vadd.f32 %v1963, %v2051
        %2053 = vmatmul.bf16.gmra.mxu0 %v1757
        %v2054 = vpop.f32.mrf.mxu0
        %v2055 = vadd.f32 %v1966, %v2054
        %v2056 = vpop.f32.mrf.mxu0
        %v2057 = vadd.f32 %v1968, %v2056
        %2058 = vmatmul.bf16.gmra.mxu0 %v1759
        %v2059 = vpop.f32.mrf.mxu0
        %v2060 = vadd.f32 %v1971, %v2059
        %v2061 = vpop.f32.mrf.mxu0
        %v2062 = vadd.f32 %v1973, %v2061
        %2063 = vmatmul.bf16.gmra.mxu0 %v1761
        %v2064 = vpop.f32.mrf.mxu0
        %v2065 = vadd.f32 %v1976, %v2064
        %v2066 = vpop.f32.mrf.mxu0
        %v2067 = vadd.f32 %v1978, %v2066
        %2068 = vmatmul.bf16.gmra.mxu0 %v1763
        %v2069 = vpop.f32.mrf.mxu0
        %v2070 = vadd.f32 %v1981, %v2069
        %v2071 = vpop.f32.mrf.mxu0
        %v2072 = vadd.f32 %v1983, %v2071
        %2073 = vdwg.mxu0
        %2074 = vst [vmem:[%s363] sm:$0xff] %v1995
        %2075 = vst [vmem:[%s363 + $0x8] sm:$0xff] %v1997
        %2076 = vst [vmem:[%s363 + $0x10] sm:$0xff] %v2000
        %2077 = vst [vmem:[%s363 + $0x18] sm:$0xff] %v2002
        %2078 = vst [vmem:[%s363 + $0x20] sm:$0xff] %v2005
        %2079 = vst [vmem:[%s363 + $0x28] sm:$0xff] %v2007
        %2080 = vst [vmem:[%s363 + $0x30] sm:$0xff] %v2010
        %2081 = vst [vmem:[%s363 + $0x38] sm:$0xff] %v2012
        %2082 = vst [vmem:[%s363 + $0x40] sm:$0xff] %v2015
        %2083 = vst [vmem:[%s363 + $0x48] sm:$0xff] %v2017
        %2084 = vst [vmem:[%s363 + $0x50] sm:$0xff] %v2020
        %2085 = vst [vmem:[%s363 + $0x58] sm:$0xff] %v2022
        %2086 = vst [vmem:[%s363 + $0x60] sm:$0xff] %v2025
        %2087 = vst [vmem:[%s363 + $0x68] sm:$0xff] %v2027
        %2088 = vst [vmem:[%s363 + $0x70] sm:$0xff] %v2030
        %2089 = vst [vmem:[%s363 + $0x78] sm:$0xff] %v2032
        %2090 = vst [vmem:[%s363 + $0x80] sm:$0xff] %v2035
        %2091 = vst [vmem:[%s363 + $0x88] sm:$0xff] %v2037
        %2092 = vst [vmem:[%s363 + $0x90] sm:$0xff] %v2040
        %2093 = vst [vmem:[%s363 + $0x98] sm:$0xff] %v2042
        %2094 = vst [vmem:[%s363 + $0xa0] sm:$0xff] %v2045
        %2095 = vst [vmem:[%s363 + $0xa8] sm:$0xff] %v2047
        %2096 = vst [vmem:[%s363 + $0xb0] sm:$0xff] %v2050
        %2097 = vst [vmem:[%s363 + $0xb8] sm:$0xff] %v2052
        %2098 = vst [vmem:[%s363 + $0xc0] sm:$0xff] %v2055
        %2099 = vst [vmem:[%s363 + $0xc8] sm:$0xff] %v2057
        %2100 = vst [vmem:[%s363 + $0xd0] sm:$0xff] %v2060
        %2101 = vst [vmem:[%s363 + $0xd8] sm:$0xff] %v2062
        %2102 = vst [vmem:[%s363 + $0xe0] sm:$0xff] %v2065
        %2103 = vst [vmem:[%s363 + $0xe8] sm:$0xff] %v2067
        %2104 = vst [vmem:[%s363 + $0xf0] sm:$0xff] %v2070
        %2105 = vst [vmem:[%s363 + $0xf8] sm:$0xff] %v2072
        %s2106 = sand.u32 %s224, 1
        %s2107 = scalar_lea.sflag [#allocation3], %s2106
        %s2108 = sand.u32 %s224, 1
        %s2109 = smul.addr %s2108, 256
        %s2110 = scalar_lea.vmem [#allocation2], %s2109
        %s2111 = sand.u32 %s252, 1
        %s2112 = scalar_lea.sflag [#allocation5], %s2111
        %s2113 = sand.u32 %s252, 1
        %s2114 = smul.addr %s2113, 256
        %s2115 = scalar_lea.vmem [#allocation4], %s2114
        // Predicated region
        $region53: #{tpu_custom_call.1} parent=51 // pred_check
          %p2116 = pneg %p234
        $region54: #{tpu_custom_call.1} parent=51 // pred_check_branch
          %2118 = sbr.rel (%p2116) target = $region56
        $region55: #{tpu_custom_call.1} parent=51 // pred_region
          %s2119 = smul.u32 2, %s32
          %2121 = vsyncadd %s2107, 0
          %s2122 = smul.addr %s31, 32
          %s2123 = sadd.s32 %s2119, %s2122
          %s2124 = smul.addr %s2123, 8
          %s2125 = scalar_lea.hbm %s8, %s2124
          %s2126 = sshll.u32 %s2110, 4
          %s2127 = int_to_ptr.vmem [resolvable:$true] %s2126
          %s2128 = sshll.u32 %s2125, 4
          %s2129 = int_to_ptr.hbm [resolvable:$true] %s2128
          %2134 = dma.vmem_to_hbm [thread:$0]  %s2127, 4096, %s2129, %s2107, 256, 256, 16
        $region56: #{tpu_custom_call.1} parent=51 // pred_fallthru
          _
        // Predicated region
        $region57: #{tpu_custom_call.1} parent=51 // pred_check
          %p2135 = pneg %p262
        $region58: #{tpu_custom_call.1} parent=51 // pred_check_branch
          %2137 = sbr.rel (%p2135) target = $region60
        $region59: #{tpu_custom_call.1} parent=51 // pred_region
          %s2138 = smul.u32 32, %s32
          %2140 = vsyncadd %s2112, 0
          %s2141 = smul.addr %s31, 32
          %s2142 = sadd.s32 %s2138, %s2141
          %s2143 = smul.addr %s2142, 8
          %s2144 = scalar_lea.hbm %s9, %s2143
          %s2145 = sshll.u32 %s2115, 4
          %s2146 = int_to_ptr.vmem [resolvable:$true] %s2145
          %s2147 = sshll.u32 %s2144, 4
          %s2148 = int_to_ptr.hbm [resolvable:$true] %s2147
          %2153 = dma.vmem_to_hbm [thread:$0]  %s2146, 4096, %s2148, %s2112, 128, 128, 8
        $region60: #{tpu_custom_call.1} parent=51 // pred_fallthru
          _
      $region52: #{tpu_custom_call.1} parent=5 // pred_fallthru
        _
      %p2154 = scmp.le.s32.totalorder 2, %s22
      // Predicated region
      $region61: #{tpu_custom_call.1} parent=5 // pred_check
        %p2155 = pneg %p2154
      $region62: #{tpu_custom_call.1} parent=5 // pred_check_branch
        %2157 = sbr.rel (%p2155) target = $region64
      $region63: #{tpu_custom_call.1} parent=5 // pred_region
        %s2158 = ssub.s32 %s22, 2
        // Predicated region
        $region65: #{tpu_custom_call.1} parent=63 // pred_check
          %p2159 = pneg %p240
        $region66: #{tpu_custom_call.1} parent=63 // pred_check_branch
          %2161 = sbr.rel (%p2159) target = $region68
        $region67: #{tpu_custom_call.1} parent=63 // pred_region
          %s2162 = sand.u32 %s225, 1
          %s2163 = scalar_lea.sflag [#allocation3], %s2162
          %s2164 = sand.u32 %s225, 1
          %s2165 = smul.addr %s2164, 256
          %s2166 = scalar_lea.vmem [#allocation2], %s2165
          %2168 = dma.done %s2163, 4096
        $region68: #{tpu_custom_call.1} parent=63 // pred_fallthru
          _
        // Predicated region
        $region69: #{tpu_custom_call.1} parent=63 // pred_check
          %p2169 = pneg %p268
        $region70: #{tpu_custom_call.1} parent=63 // pred_check_branch
          %2171 = sbr.rel (%p2169) target = $region72
        $region71: #{tpu_custom_call.1} parent=63 // pred_region
          %s2172 = sand.u32 %s253, 1
          %s2173 = scalar_lea.sflag [#allocation5], %s2172
          %s2174 = sand.u32 %s253, 1
          %s2175 = smul.addr %s2174, 256
          %s2176 = scalar_lea.vmem [#allocation4], %s2175
          %2178 = dma.done %s2173, 4096
        $region72: #{tpu_custom_call.1} parent=63 // pred_fallthru
          _
      $region64: #{tpu_custom_call.1} parent=5 // pred_fallthru
        _
    $region6: #{tpu_custom_call.1} parent=1 // loop_footer
      %s26 = sadd.s32 1, %s22
    $region7: #{tpu_custom_call.1} parent=1 // loop_footer_branch
      %21 = sbr.rel target = $region3
    $region8: #{tpu_custom_call.1} parent=1 // loop_exit
      _
    %2179 = vsyncpa [#allocation3], 1
    %s2180 = scalar_lea.sflag [#allocation3], 1
    %2181 = vsyncpa %s2180, 1
    %2182 = vsyncpa [#allocation5], 1
    %s2183 = scalar_lea.sflag [#allocation5], 1
    %2184 = vsyncpa %s2183, 1

</llo_original>
